<compile_context>
chip_gen: v7x
topology: tpu7x:2x2x1
jax: 0.10.0
libtpu: 0.0.40
codegen_flags: <defaults>
</compile_context>

<pallas_src>
import math
import jax
import jax.numpy as jnp
from jax.experimental import pallas as pl
from jax.experimental.pallas import tpu as pltpu

# ---- small synthetic ViT config (ViTModel.pooler_output semantics, scaled down) ----
B = 2            # batch
C = 3            # image channels
IMG = 16         # image height/width
PATCH = 8        # patch size
GRID = IMG // PATCH
NPATCH = GRID * GRID            # 4
SEQ = NPATCH + 1                # CLS + patches = 5
HID = 32                        # hidden size
NHEADS = 4
HEAD_DIM = HID // NHEADS        # 8
MLP = 64                        # intermediate size
NLAYERS = 2
EPS = 1e-12                     # HF ViT layer_norm_eps

TOK = B * SEQ                   # 10 tokens (batch collapsed into rows)
NP_ALL = B * NPATCH             # 8 patches total
CPP = C * PATCH * PATCH         # 192 flattened-patch features
STACK = NHEADS * TOK            # 40 head-stacked rows


def _align(n, a):
    return ((n + a - 1) // a) * a


# ---- f32 constant slab [CROWS, 128]: section rows (sublane-aligned starts) ----
CW = 128
ROW_EMB = 0                                   # TOK rows: per-token additive embedding
ROW_MSTACK = _align(ROW_EMB + TOK, 8)         # STACK rows: per-(head,token) 0/1 lane masks
ROW_ABIASR = _align(ROW_MSTACK + STACK, 8)    # STACK rows: cross-batch bias, tiled per head (cols 0:TOK)
ROW_REP = _align(ROW_ABIASR + STACK, 8)       # STACK rows: token replication matrix (cols 0:TOK)
ROW_GATHER = _align(ROW_REP + STACK, 8)       # TOK rows: head-sum gather matrix (cols 0:STACK)
ROW_SCAT = _align(ROW_GATHER + TOK, 8)        # TOK rows: patch->token scatter (cols 0:NP_ALL)
ROW_CLSSEL = _align(ROW_SCAT + TOK, 8)        # B rows: CLS-row selection (cols 0:TOK)
ROW_LNF_G = _align(ROW_CLSSEL + B, 8)
ROW_LNF_B = ROW_LNF_G + 1
ROW_BPOOL = ROW_LNF_B + 1
ROW_LAYER = _align(ROW_BPOOL + 1, 8)          # 8 rows / layer: ln1g,ln1b,ln2g,ln2b,bqkv,bo,b1,b2
CL_STRIDE = 8
CROWS = ROW_LAYER + NLAYERS * CL_STRIDE

# ---- bf16 weight slab [WROWS, 128]: section rows (16-row aligned for bf16 packing) ----
WW = 128
WROW_PE = 0                                   # CPP rows, cols 0:HID   (patch embedding)
WROW_POOL = _align(WROW_PE + CPP, 16)         # HID rows, cols 0:HID   (pooler dense)
WROW_LAYER = _align(WROW_POOL + HID, 16)      # per layer: wqkv | wo | w1 | w2
WL_STRIDE = 3 * HID + MLP                     # 160 rows / layer (multiple of 16)
WROWS = WROW_LAYER + NLAYERS * WL_STRIDE


def _layernorm(x, g, b):
    mu = jnp.mean(x, axis=-1, keepdims=True)
    var = jnp.mean(jnp.square(x - mu), axis=-1, keepdims=True)
    return (x - mu) * jax.lax.rsqrt(var + EPS) * g + b


def _gelu(x):
    # TODO(synk): HF ViT uses exact (erf) GELU; tanh approximation used here.
    c = 0.7978845608028654
    return 0.5 * x * (1.0 + jnp.tanh(c * (x + 0.044715 * x * x * x)))


# ---------------------------- the single fused Pallas kernel ----------------------------

def fused_vit_kernel(patches_ref, w_ref, c_ref, o_ref):
    bf16 = jnp.bfloat16
    patches = patches_ref[...]                               # [NP_ALL, CPP] bf16

    w_pe = w_ref[WROW_PE:WROW_PE + CPP, 0:HID]               # bf16
    w_pool = w_ref[WROW_POOL:WROW_POOL + HID, 0:HID]         # bf16

    emb = c_ref[ROW_EMB:ROW_EMB + TOK, 0:HID]                # [TOK, HID]
    m_stack = c_ref[ROW_MSTACK:ROW_MSTACK + STACK, 0:HID]    # [STACK, HID] 0/1 lane masks
    abias_r = c_ref[ROW_ABIASR:ROW_ABIASR + STACK, 0:TOK]    # [STACK, TOK] 0 / -1e30
    rep = c_ref[ROW_REP:ROW_REP + STACK, 0:TOK]              # [STACK, TOK] 0/1
    gather = c_ref[ROW_GATHER:ROW_GATHER + TOK, 0:STACK]     # [TOK, STACK] 0/1
    scat = c_ref[ROW_SCAT:ROW_SCAT + TOK, 0:NP_ALL]          # [TOK, NP_ALL] 0/1
    cls_sel = c_ref[ROW_CLSSEL:ROW_CLSSEL + B, 0:TOK]        # [B, TOK] 0/1
    lnf_g = c_ref[ROW_LNF_G:ROW_LNF_G + 1, 0:HID]
    lnf_b = c_ref[ROW_LNF_B:ROW_LNF_B + 1, 0:HID]
    b_pool = c_ref[ROW_BPOOL:ROW_BPOOL + 1, 0:HID]

    # Patch embedding + CLS/positional embedding (bf16 MXU, f32 accumulate).
    pe = jnp.dot(patches, w_pe, preferred_element_type=jnp.float32)   # [NP_ALL, HID] f32
    h = jnp.dot(scat, pe, preferred_element_type=jnp.float32) + emb   # [TOK, HID]   f32

    scale = 1.0 / math.sqrt(HEAD_DIM)
    for l in range(NLAYERS):                                 # static unrolled layer loop
        wb = WROW_LAYER + l * WL_STRIDE
        cb = ROW_LAYER + l * CL_STRIDE
        wqkv = w_ref[wb:wb + HID, 0:3 * HID]                           # bf16 [HID, 96]
        wo = w_ref[wb + HID:wb + 2 * HID, 0:HID]                       # bf16 [HID, HID]
        w1 = w_ref[wb + 2 * HID:wb + 3 * HID, 0:MLP]                   # bf16 [HID, MLP]
        w2 = w_ref[wb + 3 * HID:wb + 3 * HID + MLP, 0:HID]             # bf16 [MLP, HID]
        ln1g = c_ref[cb + 0:cb + 1, 0:HID]
        ln1b = c_ref[cb + 1:cb + 2, 0:HID]
        ln2g = c_ref[cb + 2:cb + 3, 0:HID]
        ln2b = c_ref[cb + 3:cb + 4, 0:HID]
        bqkv = c_ref[cb + 4:cb + 5, 0:3 * HID]
        bo = c_ref[cb + 5:cb + 6, 0:HID]
        b1 = c_ref[cb + 6:cb + 7, 0:MLP]
        b2 = c_ref[cb + 7:cb + 8, 0:HID]

        # --- attention block (pre-norm), heads stacked along sublanes ---
        y = _layernorm(h, ln1g, ln1b)                                  # f32
        qkv = jnp.dot(y.astype(bf16), wqkv,
                      preferred_element_type=jnp.float32) + bqkv       # [TOK, 3*HID] f32
        q = qkv[:, 0:HID] * scale
        k = qkv[:, HID:2 * HID]
        v = qkv[:, 2 * HID:3 * HID]

        # q_stack row (h*TOK + i) = q[i,:] masked to head h's lanes.
        q_stack = jnp.dot(rep, q, preferred_element_type=jnp.float32) * m_stack
        # One NT score matmul for all heads, one softmax (manual, approx recip).
        s = jax.lax.dot_general(q_stack.astype(bf16), k.astype(bf16),
                                (((1,), (1,)), ((), ())),
                                preferred_element_type=jnp.float32) + abias_r  # [STACK, TOK]
        s_max = jnp.max(s, axis=-1, keepdims=True)
        e = jnp.exp(s - s_max)
        p = e * pl.reciprocal(jnp.sum(e, axis=-1, keepdims=True), approx=True)
        ctx_stack = jnp.dot(p.astype(bf16), v.astype(bf16),
                            preferred_element_type=jnp.float32)        # [STACK, HID]
        # Mask each head's lanes and fold the head stack back into [TOK, HID].
        ctx = jnp.dot(gather, ctx_stack * m_stack,
                      preferred_element_type=jnp.float32)              # [TOK, HID]
        attn = jnp.dot(ctx.astype(bf16), wo,
                       preferred_element_type=jnp.float32) + bo
        h = h + attn

        # --- MLP block (pre-norm) ---
        y2 = _layernorm(h, ln2g, ln2b)
        ff = _gelu(jnp.dot(y2.astype(bf16), w1,
                           preferred_element_type=jnp.float32) + b1)
        ff2 = jnp.dot(ff.astype(bf16), w2,
                      preferred_element_type=jnp.float32) + b2
        h = h + ff2

    # --- pooler: pull CLS rows, LN only on CLS, dense + tanh ---
    cls = jnp.dot(cls_sel, h, preferred_element_type=jnp.float32)      # [B, HID]
    yc = _layernorm(cls, lnf_g, lnf_b)
    o_ref[...] = jnp.tanh(jnp.dot(yc.astype(bf16), w_pool,
                                  preferred_element_type=jnp.float32) + b_pool)


# ---------------------------- wrapper ----------------------------

def visual_encoder_forward(pixel_values, packed):
    # Patchify (glue): NCHW -> [B*NPATCH, C*PATCH*PATCH] in (C, ph, pw) order,
    # identical to Conv2d(C, HID, kernel=PATCH, stride=PATCH) as a matmul.
    x = pixel_values.reshape(B, C, GRID, PATCH, GRID, PATCH)
    patches = x.transpose(0, 2, 4, 1, 3, 5).reshape(B * NPATCH, CPP).astype(jnp.bfloat16)

    vmem = pltpu.MemorySpace.VMEM
    return pl.pallas_call(
        fused_vit_kernel,
        in_specs=[pl.BlockSpec(memory_space=vmem),
                  pl.BlockSpec(memory_space=vmem),
                  pl.BlockSpec(memory_space=vmem)],
        out_specs=pl.BlockSpec(memory_space=vmem),
        out_shape=jax.ShapeDtypeStruct((B, HID), jnp.float32),
    )(patches, packed["wslab"], packed["cslab"])


# ---------------------------- parameter init & packing ----------------------------

def init_params(key):
    ks = iter(jax.random.split(key, 128))

    def nrm(shape, scale=0.02):
        return scale * jax.random.normal(next(ks), shape, dtype=jnp.float32)

    params = {
        "w_pe": nrm((CPP, HID)),   # conv weight [HID,C,P,P] -> [C*P*P, HID]
        "b_pe": nrm((1, HID)),
        "cls": nrm((1, 1, HID)),
        "pos": nrm((1, SEQ, HID)),
        "lnf_g": jnp.ones((1, HID), jnp.float32),
        "lnf_b": jnp.zeros((1, HID), jnp.float32),
        "w_pool": nrm((HID, HID)),
        "b_pool": jnp.zeros((1, HID), jnp.float32),
        "layers": [],
    }
    for _ in range(NLAYERS):
        params["layers"].append({
            "ln1g": jnp.ones((1, HID), jnp.float32),
            "ln1b": jnp.zeros((1, HID), jnp.float32),
            "wq": nrm((HID, HID)), "bq": jnp.zeros((1, HID), jnp.float32),
            "wk": nrm((HID, HID)), "bk": jnp.zeros((1, HID), jnp.float32),
            "wv": nrm((HID, HID)), "bv": jnp.zeros((1, HID), jnp.float32),
            "wo": nrm((HID, HID)), "bo": jnp.zeros((1, HID), jnp.float32),
            "ln2g": jnp.ones((1, HID), jnp.float32),
            "ln2b": jnp.zeros((1, HID), jnp.float32),
            "w1": nrm((HID, MLP)), "b1": jnp.zeros((1, MLP), jnp.float32),
            "w2": nrm((MLP, HID)), "b2": jnp.zeros((1, HID), jnp.float32),
        })
    return params


def pack_params(params):
    """One-time packing of parameters + 0/1 constant matrices into two slabs."""
    f = jnp.float32

    def put(slab, r, arr):
        arr = jnp.asarray(arr, f)
        return slab.at[r:r + arr.shape[0], 0:arr.shape[1]].set(arr)

    # Per-token additive embedding: CLS row = cls + pos[0]; patch rows = pos[1+p] + b_pe.
    cls = params["cls"][0, 0]
    pos = params["pos"][0]
    b_pe = params["b_pe"][0]
    e_one = jnp.concatenate([(cls + pos[0])[None, :], pos[1:] + b_pe[None, :]], axis=0)
    emb = jnp.tile(e_one, (B, 1))                                     # [TOK, HID]

    head_m = (jnp.arange(HID)[None, :] // HEAD_DIM
              == jnp.arange(NHEADS)[:, None]).astype(f)               # [NHEADS, HID]
    m_stack = jnp.repeat(head_m, TOK, axis=0)                         # [STACK, HID]

    t = jnp.arange(TOK)
    b_r, s_r = t // SEQ, t % SEQ
    abias = jnp.where(b_r[:, None] == b_r[None, :], 0.0, -1e30).astype(f)   # [TOK, TOK]
    abias_rep = jnp.tile(abias, (NHEADS, 1))                          # [STACK, TOK]
    rep = jnp.tile(jnp.eye(TOK, dtype=f), (NHEADS, 1))                # [STACK, TOK]
    gather = jnp.tile(jnp.eye(TOK, dtype=f), (1, NHEADS))             # [TOK, STACK]

    scat = ((s_r[:, None] >= 1)
            & (jnp.arange(NP_ALL)[None, :]
               == (b_r * NPATCH + s_r - 1)[:, None])).astype(f)       # [TOK, NP_ALL]
    cls_sel = (jnp.arange(TOK)[None, :]
               == (jnp.arange(B) * SEQ)[:, None]).astype(f)           # [B, TOK]

    cslab = jnp.zeros((CROWS, CW), f)
    cslab = put(cslab, ROW_EMB, emb)
    cslab = put(cslab, ROW_MSTACK, m_stack)
    cslab = put(cslab, ROW_ABIASR, abias_rep)
    cslab = put(cslab, ROW_REP, rep)
    cslab = put(cslab, ROW_GATHER, gather)
    cslab = put(cslab, ROW_SCAT, scat)
    cslab = put(cslab, ROW_CLSSEL, cls_sel)
    cslab = put(cslab, ROW_LNF_G, params["lnf_g"])
    cslab = put(cslab, ROW_LNF_B, params["lnf_b"])
    cslab = put(cslab, ROW_BPOOL, params["b_pool"])
    for l, lp in enumerate(params["layers"]):
        cb = ROW_LAYER + l * CL_STRIDE
        cslab = put(cslab, cb + 0, lp["ln1g"])
        cslab = put(cslab, cb + 1, lp["ln1b"])
        cslab = put(cslab, cb + 2, lp["ln2g"])
        cslab = put(cslab, cb + 3, lp["ln2b"])
        cslab = put(cslab, cb + 4, jnp.concatenate([lp["bq"], lp["bk"], lp["bv"]], axis=1))
        cslab = put(cslab, cb + 5, lp["bo"])
        cslab = put(cslab, cb + 6, lp["b1"])
        cslab = put(cslab, cb + 7, lp["b2"])

    wslab = jnp.zeros((WROWS, WW), f)
    wslab = put(wslab, WROW_PE, params["w_pe"])
    wslab = put(wslab, WROW_POOL, params["w_pool"])
    for l, lp in enumerate(params["layers"]):
        wb = WROW_LAYER + l * WL_STRIDE
        wslab = put(wslab, wb, jnp.concatenate([lp["wq"], lp["wk"], lp["wv"]], axis=1))
        wslab = put(wslab, wb + HID, lp["wo"])
        wslab = put(wslab, wb + 2 * HID, lp["w1"])
        wslab = put(wslab, wb + 3 * HID, lp["w2"])          # un-transposed [MLP, HID]

    return {"wslab": wslab.astype(jnp.bfloat16), "cslab": cslab}


# ---------------------------- pure-JAX reference (f32) ----------------------------

def reference_forward(pixel_values, params):
    x = pixel_values.reshape(B, C, GRID, PATCH, GRID, PATCH)
    x = x.transpose(0, 2, 4, 1, 3, 5).reshape(B, NPATCH, CPP)
    pe = x @ params["w_pe"] + params["b_pe"]
    cls = jnp.broadcast_to(params["cls"], (B, 1, HID))
    h = jnp.concatenate([cls, pe], axis=1) + params["pos"]
    for lp in params["layers"]:
        y = _layernorm(h, lp["ln1g"], lp["ln1b"])
        q = (y @ lp["wq"] + lp["bq"]).reshape(B, SEQ, NHEADS, HEAD_DIM).transpose(0, 2, 1, 3)
        k = (y @ lp["wk"] + lp["bk"]).reshape(B, SEQ, NHEADS, HEAD_DIM).transpose(0, 2, 1, 3)
        v = (y @ lp["wv"] + lp["bv"]).reshape(B, SEQ, NHEADS, HEAD_DIM).transpose(0, 2, 1, 3)
        s = jnp.einsum("bhqd,bhkd->bhqk", q, k) / math.sqrt(HEAD_DIM)
        p = jax.nn.softmax(s, axis=-1)
        ctx = jnp.einsum("bhqk,bhkd->bhqd", p, v).transpose(0, 2, 1, 3).reshape(B, SEQ, HID)
        h = h + (ctx @ lp["wo"] + lp["bo"])
        y2 = _layernorm(h, lp["ln2g"], lp["ln2b"])
        h = h + (_gelu(y2 @ lp["w1"] + lp["b1"]) @ lp["w2"] + lp["b2"])
    y = _layernorm(h, params["lnf_g"], params["lnf_b"])
    return jnp.tanh(y[:, 0, :] @ params["w_pool"] + params["b_pool"])


if __name__ == "__main__":
    key = jax.random.PRNGKey(0)
    kx, kp = jax.random.split(key)
    pixel_values = jax.random.normal(kx, (B, C, IMG, IMG), dtype=jnp.float32)
    params = init_params(kp)
    packed = pack_params(params)

    fwd = jax.jit(visual_encoder_forward)
    out = jax.block_until_ready(fwd(pixel_values, packed))

    ref = reference_forward(pixel_values, params)
    assert out.shape == (B, HID), out.shape
    err = float(jnp.max(jnp.abs(out - ref)))
    # bf16 MXU operands + approx reciprocal vs. the f32 reference -> slightly looser tol.
    assert jnp.allclose(out, ref, rtol=2e-2, atol=2e-2), f"max abs err {err}"
    print("KERNEL_OK")
</pallas_src>

<mosaic_0001>
module attributes {stable_mosaic.version = 11 : i64} {
  func.func @fused_vit_kernel(%arg0: memref<8x192xbf16, #tpu.memory_space<vmem>>, %arg1: memref<544x128xbf16, #tpu.memory_space<vmem>>, %arg2: memref<200x128xf32, #tpu.memory_space<vmem>>, %arg3: memref<2x32xf32, #tpu.memory_space<vmem>>) attributes {dimension_semantics = [], scalar_prefetch = 0 : i64, scratch_operands = 0 : i64, tpu.core_type = #tpu.core_type<tc>} {
    %c0 = arith.constant 0 : index
    %c0_0 = arith.constant 0 : index
    %0 = vector.load %arg0[%c0, %c0_0] : memref<8x192xbf16, #tpu.memory_space<vmem>>, vector<8x192xbf16>
    %c0_1 = arith.constant 0 : index
    %c0_2 = arith.constant 0 : index
    %1 = vector.load %arg1[%c0_1, %c0_2] : memref<544x128xbf16, #tpu.memory_space<vmem>>, vector<192x32xbf16>
    %c192 = arith.constant 192 : index
    %c0_3 = arith.constant 0 : index
    %2 = vector.load %arg1[%c192, %c0_3] : memref<544x128xbf16, #tpu.memory_space<vmem>>, vector<32x32xbf16>
    %c0_4 = arith.constant 0 : index
    %c0_5 = arith.constant 0 : index
    %3 = vector.load %arg2[%c0_4, %c0_5] : memref<200x128xf32, #tpu.memory_space<vmem>>, vector<10x32xf32>
    %c16 = arith.constant 16 : index
    %c0_6 = arith.constant 0 : index
    %4 = vector.load %arg2[%c16, %c0_6] : memref<200x128xf32, #tpu.memory_space<vmem>>, vector<40x32xf32>
    %c56 = arith.constant 56 : index
    %c0_7 = arith.constant 0 : index
    %5 = vector.load %arg2[%c56, %c0_7] : memref<200x128xf32, #tpu.memory_space<vmem>>, vector<40x10xf32>
    %c96 = arith.constant 96 : index
    %c0_8 = arith.constant 0 : index
    %6 = vector.load %arg2[%c96, %c0_8] : memref<200x128xf32, #tpu.memory_space<vmem>>, vector<40x10xf32>
    %c136 = arith.constant 136 : index
    %c0_9 = arith.constant 0 : index
    %7 = vector.load %arg2[%c136, %c0_9] : memref<200x128xf32, #tpu.memory_space<vmem>>, vector<10x40xf32>
    %c152 = arith.constant 152 : index
    %c0_10 = arith.constant 0 : index
    %8 = vector.load %arg2[%c152, %c0_10] : memref<200x128xf32, #tpu.memory_space<vmem>>, vector<10x8xf32>
    %c168 = arith.constant 168 : index
    %c0_11 = arith.constant 0 : index
    %9 = vector.load %arg2[%c168, %c0_11] : memref<200x128xf32, #tpu.memory_space<vmem>>, vector<2x10xf32>
    %c176 = arith.constant 176 : index
    %c0_12 = arith.constant 0 : index
    %10 = vector.load %arg2[%c176, %c0_12] : memref<200x128xf32, #tpu.memory_space<vmem>>, vector<1x32xf32>
    %c177 = arith.constant 177 : index
    %c0_13 = arith.constant 0 : index
    %11 = vector.load %arg2[%c177, %c0_13] : memref<200x128xf32, #tpu.memory_space<vmem>>, vector<1x32xf32>
    %c178 = arith.constant 178 : index
    %c0_14 = arith.constant 0 : index
    %12 = vector.load %arg2[%c178, %c0_14] : memref<200x128xf32, #tpu.memory_space<vmem>>, vector<1x32xf32>
    %cst = arith.constant dense<0.000000e+00> : vector<8x32xf32>
    %13 = tpu.matmul %0, %1, %cst {dimension_numbers = #tpu.dot_dimension_numbers<[1], [0], [0], [1], [0, 0, 1, 1], [], []>} : vector<8x192xbf16>, vector<192x32xbf16>, vector<8x32xf32> -> vector<8x32xf32>
    %cst_15 = arith.constant dense<0.000000e+00> : vector<10x32xf32>
    %14 = tpu.matmul %8, %13, %cst_15 {dimension_numbers = #tpu.dot_dimension_numbers<[1], [0], [0], [1], [0, 0, 1, 1], [], []>} : vector<10x8xf32>, vector<8x32xf32>, vector<10x32xf32> -> vector<10x32xf32>
    %15 = arith.addf %14, %3 : vector<10x32xf32>
    %c224 = arith.constant 224 : index
    %c0_16 = arith.constant 0 : index
    %16 = vector.load %arg1[%c224, %c0_16] : memref<544x128xbf16, #tpu.memory_space<vmem>>, vector<32x96xbf16>
    %c256 = arith.constant 256 : index
    %c0_17 = arith.constant 0 : index
    %17 = vector.load %arg1[%c256, %c0_17] : memref<544x128xbf16, #tpu.memory_space<vmem>>, vector<32x32xbf16>
    %c288 = arith.constant 288 : index
    %c0_18 = arith.constant 0 : index
    %18 = vector.load %arg1[%c288, %c0_18] : memref<544x128xbf16, #tpu.memory_space<vmem>>, vector<32x64xbf16>
    %c320 = arith.constant 320 : index
    %c0_19 = arith.constant 0 : index
    %19 = vector.load %arg1[%c320, %c0_19] : memref<544x128xbf16, #tpu.memory_space<vmem>>, vector<64x32xbf16>
    %c184 = arith.constant 184 : index
    %c0_20 = arith.constant 0 : index
    %20 = vector.load %arg2[%c184, %c0_20] : memref<200x128xf32, #tpu.memory_space<vmem>>, vector<1x32xf32>
    %c185 = arith.constant 185 : index
    %c0_21 = arith.constant 0 : index
    %21 = vector.load %arg2[%c185, %c0_21] : memref<200x128xf32, #tpu.memory_space<vmem>>, vector<1x32xf32>
    %c186 = arith.constant 186 : index
    %c0_22 = arith.constant 0 : index
    %22 = vector.load %arg2[%c186, %c0_22] : memref<200x128xf32, #tpu.memory_space<vmem>>, vector<1x32xf32>
    %c187 = arith.constant 187 : index
    %c0_23 = arith.constant 0 : index
    %23 = vector.load %arg2[%c187, %c0_23] : memref<200x128xf32, #tpu.memory_space<vmem>>, vector<1x32xf32>
    %c188 = arith.constant 188 : index
    %c0_24 = arith.constant 0 : index
    %24 = vector.load %arg2[%c188, %c0_24] : memref<200x128xf32, #tpu.memory_space<vmem>>, vector<1x96xf32>
    %c189 = arith.constant 189 : index
    %c0_25 = arith.constant 0 : index
    %25 = vector.load %arg2[%c189, %c0_25] : memref<200x128xf32, #tpu.memory_space<vmem>>, vector<1x32xf32>
    %c190 = arith.constant 190 : index
    %c0_26 = arith.constant 0 : index
    %26 = vector.load %arg2[%c190, %c0_26] : memref<200x128xf32, #tpu.memory_space<vmem>>, vector<1x64xf32>
    %c191 = arith.constant 191 : index
    %c0_27 = arith.constant 0 : index
    %27 = vector.load %arg2[%c191, %c0_27] : memref<200x128xf32, #tpu.memory_space<vmem>>, vector<1x32xf32>
    %cst_28 = arith.constant dense<0.000000e+00> : vector<10xf32>
    %28 = vector.multi_reduction <add>, %15, %cst_28 [1] : vector<10x32xf32> to vector<10xf32>
    %29 = vector.shape_cast %28 : vector<10xf32> to vector<10x1xf32>
    %cst_29 = arith.constant 3.200000e+01 : f32
    %30 = vector.broadcast %cst_29 : f32 to vector<10x1xf32>
    %31 = arith.divf %29, %30 : vector<10x1xf32>
    %32 = vector.broadcast %31 : vector<10x1xf32> to vector<10x32xf32>
    %33 = arith.subf %15, %32 : vector<10x32xf32>
    %34 = arith.mulf %33, %33 : vector<10x32xf32>
    %cst_30 = arith.constant dense<0.000000e+00> : vector<10xf32>
    %35 = vector.multi_reduction <add>, %34, %cst_30 [1] : vector<10x32xf32> to vector<10xf32>
    %36 = vector.shape_cast %35 : vector<10xf32> to vector<10x1xf32>
    %cst_31 = arith.constant 3.200000e+01 : f32
    %37 = vector.broadcast %cst_31 : f32 to vector<10x1xf32>
    %38 = arith.divf %36, %37 : vector<10x1xf32>
    %39 = vector.broadcast %31 : vector<10x1xf32> to vector<10x32xf32>
    %40 = arith.subf %15, %39 : vector<10x32xf32>
    %cst_32 = arith.constant 9.99999996E-13 : f32
    %41 = vector.broadcast %cst_32 : f32 to vector<10x1xf32>
    %42 = arith.addf %38, %41 : vector<10x1xf32>
    %43 = math.rsqrt %42 : vector<10x1xf32>
    %44 = vector.broadcast %43 : vector<10x1xf32> to vector<10x32xf32>
    %45 = arith.mulf %40, %44 : vector<10x32xf32>
    %46 = vector.broadcast %20 : vector<1x32xf32> to vector<10x32xf32>
    %47 = arith.mulf %45, %46 : vector<10x32xf32>
    %48 = vector.broadcast %21 : vector<1x32xf32> to vector<10x32xf32>
    %49 = arith.addf %47, %48 : vector<10x32xf32>
    %50 = arith.truncf %49 : vector<10x32xf32> to vector<10x32xbf16>
    %cst_33 = arith.constant dense<0.000000e+00> : vector<10x96xf32>
    %51 = tpu.matmul %50, %16, %cst_33 {dimension_numbers = #tpu.dot_dimension_numbers<[1], [0], [0], [1], [0, 0, 1, 1], [], []>} : vector<10x32xbf16>, vector<32x96xbf16>, vector<10x96xf32> -> vector<10x96xf32>
    %52 = vector.broadcast %24 : vector<1x96xf32> to vector<10x96xf32>
    %53 = arith.addf %51, %52 : vector<10x96xf32>
    %54 = vector.extract_strided_slice %53 {offsets = [0, 0], sizes = [10, 32], strides = [1, 1]} : vector<10x96xf32> to vector<10x32xf32>
    %cst_34 = arith.constant 0.353553385 : f32
    %55 = vector.broadcast %cst_34 : f32 to vector<10x32xf32>
    %56 = arith.mulf %54, %55 : vector<10x32xf32>
    %57 = vector.extract_strided_slice %53 {offsets = [0, 32], sizes = [10, 32], strides = [1, 1]} : vector<10x96xf32> to vector<10x32xf32>
    %58 = vector.extract_strided_slice %53 {offsets = [0, 64], sizes = [10, 32], strides = [1, 1]} : vector<10x96xf32> to vector<10x32xf32>
    %cst_35 = arith.constant dense<0.000000e+00> : vector<40x32xf32>
    %59 = tpu.matmul %6, %56, %cst_35 {dimension_numbers = #tpu.dot_dimension_numbers<[1], [0], [0], [1], [0, 0, 1, 1], [], []>} : vector<40x10xf32>, vector<10x32xf32>, vector<40x32xf32> -> vector<40x32xf32>
    %60 = arith.mulf %59, %4 : vector<40x32xf32>
    %61 = arith.truncf %60 : vector<40x32xf32> to vector<40x32xbf16>
    %62 = arith.truncf %57 : vector<10x32xf32> to vector<10x32xbf16>
    %cst_36 = arith.constant dense<0.000000e+00> : vector<40x10xf32>
    %63 = tpu.matmul %61, %62, %cst_36 {dimension_numbers = #tpu.dot_dimension_numbers<[1], [1], [0], [0], [0, 0, 1, 0], [], []>} : vector<40x32xbf16>, vector<10x32xbf16>, vector<40x10xf32> -> vector<40x10xf32>
    %64 = arith.addf %63, %5 : vector<40x10xf32>
    %cst_37 = arith.constant dense<0xFF800000> : vector<40xf32>
    %65 = vector.multi_reduction <maximumf>, %64, %cst_37 [1] : vector<40x10xf32> to vector<40xf32>
    %66 = vector.shape_cast %65 : vector<40xf32> to vector<40x1xf32>
    %67 = vector.broadcast %66 : vector<40x1xf32> to vector<40x10xf32>
    %68 = arith.subf %64, %67 : vector<40x10xf32>
    %69 = math.exp %68 : vector<40x10xf32>
    %cst_38 = arith.constant dense<0.000000e+00> : vector<40xf32>
    %70 = vector.multi_reduction <add>, %69, %cst_38 [1] : vector<40x10xf32> to vector<40xf32>
    %71 = vector.shape_cast %70 : vector<40xf32> to vector<40x1xf32>
    %72 = tpu.reciprocal %71 {approx = true} : vector<40x1xf32> -> vector<40x1xf32>
    %73 = vector.broadcast %72 : vector<40x1xf32> to vector<40x10xf32>
    %74 = arith.mulf %69, %73 : vector<40x10xf32>
    %75 = arith.truncf %74 : vector<40x10xf32> to vector<40x10xbf16>
    %76 = arith.truncf %58 : vector<10x32xf32> to vector<10x32xbf16>
    %cst_39 = arith.constant dense<0.000000e+00> : vector<40x32xf32>
    %77 = tpu.matmul %75, %76, %cst_39 {dimension_numbers = #tpu.dot_dimension_numbers<[1], [0], [0], [1], [0, 0, 1, 1], [], []>} : vector<40x10xbf16>, vector<10x32xbf16>, vector<40x32xf32> -> vector<40x32xf32>
    %78 = arith.mulf %77, %4 : vector<40x32xf32>
    %cst_40 = arith.constant dense<0.000000e+00> : vector<10x32xf32>
    %79 = tpu.matmul %7, %78, %cst_40 {dimension_numbers = #tpu.dot_dimension_numbers<[1], [0], [0], [1], [0, 0, 1, 1], [], []>} : vector<10x40xf32>, vector<40x32xf32>, vector<10x32xf32> -> vector<10x32xf32>
    %80 = arith.truncf %79 : vector<10x32xf32> to vector<10x32xbf16>
    %cst_41 = arith.constant dense<0.000000e+00> : vector<10x32xf32>
    %81 = tpu.matmul %80, %17, %cst_41 {dimension_numbers = #tpu.dot_dimension_numbers<[1], [0], [0], [1], [0, 0, 1, 1], [], []>} : vector<10x32xbf16>, vector<32x32xbf16>, vector<10x32xf32> -> vector<10x32xf32>
    %82 = vector.broadcast %25 : vector<1x32xf32> to vector<10x32xf32>
    %83 = arith.addf %81, %82 : vector<10x32xf32>
    %84 = arith.addf %15, %83 : vector<10x32xf32>
    %cst_42 = arith.constant dense<0.000000e+00> : vector<10xf32>
    %85 = vector.multi_reduction <add>, %84, %cst_42 [1] : vector<10x32xf32> to vector<10xf32>
    %86 = vector.shape_cast %85 : vector<10xf32> to vector<10x1xf32>
    %cst_43 = arith.constant 3.200000e+01 : f32
    %87 = vector.broadcast %cst_43 : f32 to vector<10x1xf32>
    %88 = arith.divf %86, %87 : vector<10x1xf32>
    %89 = vector.broadcast %88 : vector<10x1xf32> to vector<10x32xf32>
    %90 = arith.subf %84, %89 : vector<10x32xf32>
    %91 = arith.mulf %90, %90 : vector<10x32xf32>
    %cst_44 = arith.constant dense<0.000000e+00> : vector<10xf32>
    %92 = vector.multi_reduction <add>, %91, %cst_44 [1] : vector<10x32xf32> to vector<10xf32>
    %93 = vector.shape_cast %92 : vector<10xf32> to vector<10x1xf32>
    %cst_45 = arith.constant 3.200000e+01 : f32
    %94 = vector.broadcast %cst_45 : f32 to vector<10x1xf32>
    %95 = arith.divf %93, %94 : vector<10x1xf32>
    %96 = vector.broadcast %88 : vector<10x1xf32> to vector<10x32xf32>
    %97 = arith.subf %84, %96 : vector<10x32xf32>
    %cst_46 = arith.constant 9.99999996E-13 : f32
    %98 = vector.broadcast %cst_46 : f32 to vector<10x1xf32>
    %99 = arith.addf %95, %98 : vector<10x1xf32>
    %100 = math.rsqrt %99 : vector<10x1xf32>
    %101 = vector.broadcast %100 : vector<10x1xf32> to vector<10x32xf32>
    %102 = arith.mulf %97, %101 : vector<10x32xf32>
    %103 = vector.broadcast %22 : vector<1x32xf32> to vector<10x32xf32>
    %104 = arith.mulf %102, %103 : vector<10x32xf32>
    %105 = vector.broadcast %23 : vector<1x32xf32> to vector<10x32xf32>
    %106 = arith.addf %104, %105 : vector<10x32xf32>
    %107 = arith.truncf %106 : vector<10x32xf32> to vector<10x32xbf16>
    %cst_47 = arith.constant dense<0.000000e+00> : vector<10x64xf32>
    %108 = tpu.matmul %107, %18, %cst_47 {dimension_numbers = #tpu.dot_dimension_numbers<[1], [0], [0], [1], [0, 0, 1, 1], [], []>} : vector<10x32xbf16>, vector<32x64xbf16>, vector<10x64xf32> -> vector<10x64xf32>
    %109 = vector.broadcast %26 : vector<1x64xf32> to vector<10x64xf32>
    %110 = arith.addf %108, %109 : vector<10x64xf32>
    %cst_48 = arith.constant 5.000000e-01 : f32
    %111 = vector.broadcast %cst_48 : f32 to vector<10x64xf32>
    %112 = arith.mulf %111, %110 : vector<10x64xf32>
    %cst_49 = arith.constant 4.471500e-02 : f32
    %113 = vector.broadcast %cst_49 : f32 to vector<10x64xf32>
    %114 = arith.mulf %113, %110 : vector<10x64xf32>
    %115 = arith.mulf %114, %110 : vector<10x64xf32>
    %116 = arith.mulf %115, %110 : vector<10x64xf32>
    %117 = arith.addf %110, %116 : vector<10x64xf32>
    %cst_50 = arith.constant 0.797884583 : f32
    %118 = vector.broadcast %cst_50 : f32 to vector<10x64xf32>
    %119 = arith.mulf %118, %117 : vector<10x64xf32>
    %120 = math.tanh %119 : vector<10x64xf32>
    %cst_51 = arith.constant 1.000000e+00 : f32
    %121 = vector.broadcast %cst_51 : f32 to vector<10x64xf32>
    %122 = arith.addf %121, %120 : vector<10x64xf32>
    %123 = arith.mulf %112, %122 : vector<10x64xf32>
    %124 = arith.truncf %123 : vector<10x64xf32> to vector<10x64xbf16>
    %cst_52 = arith.constant dense<0.000000e+00> : vector<10x32xf32>
    %125 = tpu.matmul %124, %19, %cst_52 {dimension_numbers = #tpu.dot_dimension_numbers<[1], [0], [0], [1], [0, 0, 1, 1], [], []>} : vector<10x64xbf16>, vector<64x32xbf16>, vector<10x32xf32> -> vector<10x32xf32>
    %126 = vector.broadcast %27 : vector<1x32xf32> to vector<10x32xf32>
    %127 = arith.addf %125, %126 : vector<10x32xf32>
    %128 = arith.addf %84, %127 : vector<10x32xf32>
    %c384 = arith.constant 384 : index
    %c0_53 = arith.constant 0 : index
    %129 = vector.load %arg1[%c384, %c0_53] : memref<544x128xbf16, #tpu.memory_space<vmem>>, vector<32x96xbf16>
    %c416 = arith.constant 416 : index
    %c0_54 = arith.constant 0 : index
    %130 = vector.load %arg1[%c416, %c0_54] : memref<544x128xbf16, #tpu.memory_space<vmem>>, vector<32x32xbf16>
    %c448 = arith.constant 448 : index
    %c0_55 = arith.constant 0 : index
    %131 = vector.load %arg1[%c448, %c0_55] : memref<544x128xbf16, #tpu.memory_space<vmem>>, vector<32x64xbf16>
    %c480 = arith.constant 480 : index
    %c0_56 = arith.constant 0 : index
    %132 = vector.load %arg1[%c480, %c0_56] : memref<544x128xbf16, #tpu.memory_space<vmem>>, vector<64x32xbf16>
    %c192_57 = arith.constant 192 : index
    %c0_58 = arith.constant 0 : index
    %133 = vector.load %arg2[%c192_57, %c0_58] : memref<200x128xf32, #tpu.memory_space<vmem>>, vector<1x32xf32>
    %c193 = arith.constant 193 : index
    %c0_59 = arith.constant 0 : index
    %134 = vector.load %arg2[%c193, %c0_59] : memref<200x128xf32, #tpu.memory_space<vmem>>, vector<1x32xf32>
    %c194 = arith.constant 194 : index
    %c0_60 = arith.constant 0 : index
    %135 = vector.load %arg2[%c194, %c0_60] : memref<200x128xf32, #tpu.memory_space<vmem>>, vector<1x32xf32>
    %c195 = arith.constant 195 : index
    %c0_61 = arith.constant 0 : index
    %136 = vector.load %arg2[%c195, %c0_61] : memref<200x128xf32, #tpu.memory_space<vmem>>, vector<1x32xf32>
    %c196 = arith.constant 196 : index
    %c0_62 = arith.constant 0 : index
    %137 = vector.load %arg2[%c196, %c0_62] : memref<200x128xf32, #tpu.memory_space<vmem>>, vector<1x96xf32>
    %c197 = arith.constant 197 : index
    %c0_63 = arith.constant 0 : index
    %138 = vector.load %arg2[%c197, %c0_63] : memref<200x128xf32, #tpu.memory_space<vmem>>, vector<1x32xf32>
    %c198 = arith.constant 198 : index
    %c0_64 = arith.constant 0 : index
    %139 = vector.load %arg2[%c198, %c0_64] : memref<200x128xf32, #tpu.memory_space<vmem>>, vector<1x64xf32>
    %c199 = arith.constant 199 : index
    %c0_65 = arith.constant 0 : index
    %140 = vector.load %arg2[%c199, %c0_65] : memref<200x128xf32, #tpu.memory_space<vmem>>, vector<1x32xf32>
    %cst_66 = arith.constant dense<0.000000e+00> : vector<10xf32>
    %141 = vector.multi_reduction <add>, %128, %cst_66 [1] : vector<10x32xf32> to vector<10xf32>
    %142 = vector.shape_cast %141 : vector<10xf32> to vector<10x1xf32>
    %cst_67 = arith.constant 3.200000e+01 : f32
    %143 = vector.broadcast %cst_67 : f32 to vector<10x1xf32>
    %144 = arith.divf %142, %143 : vector<10x1xf32>
    %145 = vector.broadcast %144 : vector<10x1xf32> to vector<10x32xf32>
    %146 = arith.subf %128, %145 : vector<10x32xf32>
    %147 = arith.mulf %146, %146 : vector<10x32xf32>
    %cst_68 = arith.constant dense<0.000000e+00> : vector<10xf32>
    %148 = vector.multi_reduction <add>, %147, %cst_68 [1] : vector<10x32xf32> to vector<10xf32>
    %149 = vector.shape_cast %148 : vector<10xf32> to vector<10x1xf32>
    %cst_69 = arith.constant 3.200000e+01 : f32
    %150 = vector.broadcast %cst_69 : f32 to vector<10x1xf32>
    %151 = arith.divf %149, %150 : vector<10x1xf32>
    %152 = vector.broadcast %144 : vector<10x1xf32> to vector<10x32xf32>
    %153 = arith.subf %128, %152 : vector<10x32xf32>
    %cst_70 = arith.constant 9.99999996E-13 : f32
    %154 = vector.broadcast %cst_70 : f32 to vector<10x1xf32>
    %155 = arith.addf %151, %154 : vector<10x1xf32>
    %156 = math.rsqrt %155 : vector<10x1xf32>
    %157 = vector.broadcast %156 : vector<10x1xf32> to vector<10x32xf32>
    %158 = arith.mulf %153, %157 : vector<10x32xf32>
    %159 = vector.broadcast %133 : vector<1x32xf32> to vector<10x32xf32>
    %160 = arith.mulf %158, %159 : vector<10x32xf32>
    %161 = vector.broadcast %134 : vector<1x32xf32> to vector<10x32xf32>
    %162 = arith.addf %160, %161 : vector<10x32xf32>
    %163 = arith.truncf %162 : vector<10x32xf32> to vector<10x32xbf16>
    %cst_71 = arith.constant dense<0.000000e+00> : vector<10x96xf32>
    %164 = tpu.matmul %163, %129, %cst_71 {dimension_numbers = #tpu.dot_dimension_numbers<[1], [0], [0], [1], [0, 0, 1, 1], [], []>} : vector<10x32xbf16>, vector<32x96xbf16>, vector<10x96xf32> -> vector<10x96xf32>
    %165 = vector.broadcast %137 : vector<1x96xf32> to vector<10x96xf32>
    %166 = arith.addf %164, %165 : vector<10x96xf32>
    %167 = vector.extract_strided_slice %166 {offsets = [0, 0], sizes = [10, 32], strides = [1, 1]} : vector<10x96xf32> to vector<10x32xf32>
    %cst_72 = arith.constant 0.353553385 : f32
    %168 = vector.broadcast %cst_72 : f32 to vector<10x32xf32>
    %169 = arith.mulf %167, %168 : vector<10x32xf32>
    %170 = vector.extract_strided_slice %166 {offsets = [0, 32], sizes = [10, 32], strides = [1, 1]} : vector<10x96xf32> to vector<10x32xf32>
    %171 = vector.extract_strided_slice %166 {offsets = [0, 64], sizes = [10, 32], strides = [1, 1]} : vector<10x96xf32> to vector<10x32xf32>
    %cst_73 = arith.constant dense<0.000000e+00> : vector<40x32xf32>
    %172 = tpu.matmul %6, %169, %cst_73 {dimension_numbers = #tpu.dot_dimension_numbers<[1], [0], [0], [1], [0, 0, 1, 1], [], []>} : vector<40x10xf32>, vector<10x32xf32>, vector<40x32xf32> -> vector<40x32xf32>
    %173 = arith.mulf %172, %4 : vector<40x32xf32>
    %174 = arith.truncf %173 : vector<40x32xf32> to vector<40x32xbf16>
    %175 = arith.truncf %170 : vector<10x32xf32> to vector<10x32xbf16>
    %cst_74 = arith.constant dense<0.000000e+00> : vector<40x10xf32>
    %176 = tpu.matmul %174, %175, %cst_74 {dimension_numbers = #tpu.dot_dimension_numbers<[1], [1], [0], [0], [0, 0, 1, 0], [], []>} : vector<40x32xbf16>, vector<10x32xbf16>, vector<40x10xf32> -> vector<40x10xf32>
    %177 = arith.addf %176, %5 : vector<40x10xf32>
    %cst_75 = arith.constant dense<0xFF800000> : vector<40xf32>
    %178 = vector.multi_reduction <maximumf>, %177, %cst_75 [1] : vector<40x10xf32> to vector<40xf32>
    %179 = vector.shape_cast %178 : vector<40xf32> to vector<40x1xf32>
    %180 = vector.broadcast %179 : vector<40x1xf32> to vector<40x10xf32>
    %181 = arith.subf %177, %180 : vector<40x10xf32>
    %182 = math.exp %181 : vector<40x10xf32>
    %cst_76 = arith.constant dense<0.000000e+00> : vector<40xf32>
    %183 = vector.multi_reduction <add>, %182, %cst_76 [1] : vector<40x10xf32> to vector<40xf32>
    %184 = vector.shape_cast %183 : vector<40xf32> to vector<40x1xf32>
    %185 = tpu.reciprocal %184 {approx = true} : vector<40x1xf32> -> vector<40x1xf32>
    %186 = vector.broadcast %185 : vector<40x1xf32> to vector<40x10xf32>
    %187 = arith.mulf %182, %186 : vector<40x10xf32>
    %188 = arith.truncf %187 : vector<40x10xf32> to vector<40x10xbf16>
    %189 = arith.truncf %171 : vector<10x32xf32> to vector<10x32xbf16>
    %cst_77 = arith.constant dense<0.000000e+00> : vector<40x32xf32>
    %190 = tpu.matmul %188, %189, %cst_77 {dimension_numbers = #tpu.dot_dimension_numbers<[1], [0], [0], [1], [0, 0, 1, 1], [], []>} : vector<40x10xbf16>, vector<10x32xbf16>, vector<40x32xf32> -> vector<40x32xf32>
    %191 = arith.mulf %190, %4 : vector<40x32xf32>
    %cst_78 = arith.constant dense<0.000000e+00> : vector<10x32xf32>
    %192 = tpu.matmul %7, %191, %cst_78 {dimension_numbers = #tpu.dot_dimension_numbers<[1], [0], [0], [1], [0, 0, 1, 1], [], []>} : vector<10x40xf32>, vector<40x32xf32>, vector<10x32xf32> -> vector<10x32xf32>
    %193 = arith.truncf %192 : vector<10x32xf32> to vector<10x32xbf16>
    %cst_79 = arith.constant dense<0.000000e+00> : vector<10x32xf32>
    %194 = tpu.matmul %193, %130, %cst_79 {dimension_numbers = #tpu.dot_dimension_numbers<[1], [0], [0], [1], [0, 0, 1, 1], [], []>} : vector<10x32xbf16>, vector<32x32xbf16>, vector<10x32xf32> -> vector<10x32xf32>
    %195 = vector.broadcast %138 : vector<1x32xf32> to vector<10x32xf32>
    %196 = arith.addf %194, %195 : vector<10x32xf32>
    %197 = arith.addf %128, %196 : vector<10x32xf32>
    %cst_80 = arith.constant dense<0.000000e+00> : vector<10xf32>
    %198 = vector.multi_reduction <add>, %197, %cst_80 [1] : vector<10x32xf32> to vector<10xf32>
    %199 = vector.shape_cast %198 : vector<10xf32> to vector<10x1xf32>
    %cst_81 = arith.constant 3.200000e+01 : f32
    %200 = vector.broadcast %cst_81 : f32 to vector<10x1xf32>
    %201 = arith.divf %199, %200 : vector<10x1xf32>
    %202 = vector.broadcast %201 : vector<10x1xf32> to vector<10x32xf32>
    %203 = arith.subf %197, %202 : vector<10x32xf32>
    %204 = arith.mulf %203, %203 : vector<10x32xf32>
    %cst_82 = arith.constant dense<0.000000e+00> : vector<10xf32>
    %205 = vector.multi_reduction <add>, %204, %cst_82 [1] : vector<10x32xf32> to vector<10xf32>
    %206 = vector.shape_cast %205 : vector<10xf32> to vector<10x1xf32>
    %cst_83 = arith.constant 3.200000e+01 : f32
    %207 = vector.broadcast %cst_83 : f32 to vector<10x1xf32>
    %208 = arith.divf %206, %207 : vector<10x1xf32>
    %209 = vector.broadcast %201 : vector<10x1xf32> to vector<10x32xf32>
    %210 = arith.subf %197, %209 : vector<10x32xf32>
    %cst_84 = arith.constant 9.99999996E-13 : f32
    %211 = vector.broadcast %cst_84 : f32 to vector<10x1xf32>
    %212 = arith.addf %208, %211 : vector<10x1xf32>
    %213 = math.rsqrt %212 : vector<10x1xf32>
    %214 = vector.broadcast %213 : vector<10x1xf32> to vector<10x32xf32>
    %215 = arith.mulf %210, %214 : vector<10x32xf32>
    %216 = vector.broadcast %135 : vector<1x32xf32> to vector<10x32xf32>
    %217 = arith.mulf %215, %216 : vector<10x32xf32>
    %218 = vector.broadcast %136 : vector<1x32xf32> to vector<10x32xf32>
    %219 = arith.addf %217, %218 : vector<10x32xf32>
    %220 = arith.truncf %219 : vector<10x32xf32> to vector<10x32xbf16>
    %cst_85 = arith.constant dense<0.000000e+00> : vector<10x64xf32>
    %221 = tpu.matmul %220, %131, %cst_85 {dimension_numbers = #tpu.dot_dimension_numbers<[1], [0], [0], [1], [0, 0, 1, 1], [], []>} : vector<10x32xbf16>, vector<32x64xbf16>, vector<10x64xf32> -> vector<10x64xf32>
    %222 = vector.broadcast %139 : vector<1x64xf32> to vector<10x64xf32>
    %223 = arith.addf %221, %222 : vector<10x64xf32>
    %cst_86 = arith.constant 5.000000e-01 : f32
    %224 = vector.broadcast %cst_86 : f32 to vector<10x64xf32>
    %225 = arith.mulf %224, %223 : vector<10x64xf32>
    %cst_87 = arith.constant 4.471500e-02 : f32
    %226 = vector.broadcast %cst_87 : f32 to vector<10x64xf32>
    %227 = arith.mulf %226, %223 : vector<10x64xf32>
    %228 = arith.mulf %227, %223 : vector<10x64xf32>
    %229 = arith.mulf %228, %223 : vector<10x64xf32>
    %230 = arith.addf %223, %229 : vector<10x64xf32>
    %cst_88 = arith.constant 0.797884583 : f32
    %231 = vector.broadcast %cst_88 : f32 to vector<10x64xf32>
    %232 = arith.mulf %231, %230 : vector<10x64xf32>
    %233 = math.tanh %232 : vector<10x64xf32>
    %cst_89 = arith.constant 1.000000e+00 : f32
    %234 = vector.broadcast %cst_89 : f32 to vector<10x64xf32>
    %235 = arith.addf %234, %233 : vector<10x64xf32>
    %236 = arith.mulf %225, %235 : vector<10x64xf32>
    %237 = arith.truncf %236 : vector<10x64xf32> to vector<10x64xbf16>
    %cst_90 = arith.constant dense<0.000000e+00> : vector<10x32xf32>
    %238 = tpu.matmul %237, %132, %cst_90 {dimension_numbers = #tpu.dot_dimension_numbers<[1], [0], [0], [1], [0, 0, 1, 1], [], []>} : vector<10x64xbf16>, vector<64x32xbf16>, vector<10x32xf32> -> vector<10x32xf32>
    %239 = vector.broadcast %140 : vector<1x32xf32> to vector<10x32xf32>
    %240 = arith.addf %238, %239 : vector<10x32xf32>
    %241 = arith.addf %197, %240 : vector<10x32xf32>
    %cst_91 = arith.constant dense<0.000000e+00> : vector<2x32xf32>
    %242 = tpu.matmul %9, %241, %cst_91 {dimension_numbers = #tpu.dot_dimension_numbers<[1], [0], [0], [1], [0, 0, 1, 1], [], []>} : vector<2x10xf32>, vector<10x32xf32>, vector<2x32xf32> -> vector<2x32xf32>
    %cst_92 = arith.constant dense<0.000000e+00> : vector<2xf32>
    %243 = vector.multi_reduction <add>, %242, %cst_92 [1] : vector<2x32xf32> to vector<2xf32>
    %244 = vector.shape_cast %243 : vector<2xf32> to vector<2x1xf32>
    %cst_93 = arith.constant 3.200000e+01 : f32
    %245 = vector.broadcast %cst_93 : f32 to vector<2x1xf32>
    %246 = arith.divf %244, %245 : vector<2x1xf32>
    %247 = vector.broadcast %246 : vector<2x1xf32> to vector<2x32xf32>
    %248 = arith.subf %242, %247 : vector<2x32xf32>
    %249 = arith.mulf %248, %248 : vector<2x32xf32>
    %cst_94 = arith.constant dense<0.000000e+00> : vector<2xf32>
    %250 = vector.multi_reduction <add>, %249, %cst_94 [1] : vector<2x32xf32> to vector<2xf32>
    %251 = vector.shape_cast %250 : vector<2xf32> to vector<2x1xf32>
    %cst_95 = arith.constant 3.200000e+01 : f32
    %252 = vector.broadcast %cst_95 : f32 to vector<2x1xf32>
    %253 = arith.divf %251, %252 : vector<2x1xf32>
    %254 = vector.broadcast %246 : vector<2x1xf32> to vector<2x32xf32>
    %255 = arith.subf %242, %254 : vector<2x32xf32>
    %cst_96 = arith.constant 9.99999996E-13 : f32
    %256 = vector.broadcast %cst_96 : f32 to vector<2x1xf32>
    %257 = arith.addf %253, %256 : vector<2x1xf32>
    %258 = math.rsqrt %257 : vector<2x1xf32>
    %259 = vector.broadcast %258 : vector<2x1xf32> to vector<2x32xf32>
    %260 = arith.mulf %255, %259 : vector<2x32xf32>
    %261 = vector.broadcast %10 : vector<1x32xf32> to vector<2x32xf32>
    %262 = arith.mulf %260, %261 : vector<2x32xf32>
    %263 = vector.broadcast %11 : vector<1x32xf32> to vector<2x32xf32>
    %264 = arith.addf %262, %263 : vector<2x32xf32>
    %265 = arith.truncf %264 : vector<2x32xf32> to vector<2x32xbf16>
    %cst_97 = arith.constant dense<0.000000e+00> : vector<2x32xf32>
    %266 = tpu.matmul %265, %2, %cst_97 {dimension_numbers = #tpu.dot_dimension_numbers<[1], [0], [0], [1], [0, 0, 1, 1], [], []>} : vector<2x32xbf16>, vector<32x32xbf16>, vector<2x32xf32> -> vector<2x32xf32>
    %267 = vector.broadcast %12 : vector<1x32xf32> to vector<2x32xf32>
    %268 = arith.addf %266, %267 : vector<2x32xf32>
    %269 = math.tanh %268 : vector<2x32xf32>
    %c0_98 = arith.constant 0 : index
    %c0_99 = arith.constant 0 : index
    %270 = vector.load %arg3[%c0_98, %c0_99] : memref<2x32xf32, #tpu.memory_space<vmem>>, vector<2x32xf32>
    tpu.vector_store %arg3[%c0_98, %c0_99], %269 {strides = array<i32>} : memref<2x32xf32, #tpu.memory_space<vmem>>, vector<2x32xf32>,
    return
  }
}

</mosaic_0001>

<llo_original>
// kernel: visual_encoder_forward.1
$region0: #{visual_encoder_forward.1}
  #allocation0 [shape = 'u32[]', space=smem, size = 0x4, offset = 0x4, fixed_abs, tag = 'smem constant byte address 0x4 - core index']
  #allocation1 [shape = 'u32[144,128]{1,0:T(1,128)}', space=vmem, size = 0x12000, scoped, tag = 'internal scratch']
  %s0 = inlined_call_operand.vmem [shape: bf16[8,192], index: 0, kind: input, shape index: {}]
  %s1 = inlined_call_operand.vmem [shape: bf16[544,128], index: 1, kind: input, shape index: {}]
  %s2 = inlined_call_operand.vmem [shape: f32[200,128], index: 2, kind: input, shape index: {}]
  %s3 = inlined_call_operand.hbm [shape: f32[2,32], index: 3, kind: output, shape index: {}]
  %s4 = sld [smem:[#allocation0]]
  $region22: #{visual_encoder_forward.1} parent=0
    _
  %s6 = ssub.s32 1, %s4
  %s7 = scalar_select 0, %s6, %s4
  $region1: #{visual_encoder_forward.1} parent=0
    #allocation2 [shape = 'u8[1024]{0}', space=vmem, size = 0x400, scoped, tag = 'output window, operand 0, single buffered']
    #allocation3 [shape = 's32[1]{0}', space=sflag, size = 0x4, scoped, tag = 'scoped memory for visual_encoder_forward.1']
    %8 = vsyncpa [#allocation3], 0
    // Predicated region
    $region2: #{visual_encoder_forward.1} parent=1 // pred_check
      _
    $region3: #{visual_encoder_forward.1} parent=1 // pred_check_branch
      %10 = sbr.rel (0) target = $region5
    $region4: #{visual_encoder_forward.1} parent=1 // pred_region
      _
    $region5: #{visual_encoder_forward.1} parent=1 // pred_fallthru
      _
    // Predicated region
    $region6: #{visual_encoder_forward.1} parent=1 // pred_check
      _
    $region7: #{visual_encoder_forward.1} parent=1 // pred_check_branch
      %12 = sbr.rel (0) target = $region9
    $region8: #{visual_encoder_forward.1} parent=1 // pred_region
      _
    $region9: #{visual_encoder_forward.1} parent=1 // pred_fallthru
      _
    // Predicated region
    $region10: #{visual_encoder_forward.1} parent=1 // pred_check
      _
    $region11: #{visual_encoder_forward.1} parent=1 // pred_check_branch
      %14 = sbr.rel (0) target = $region13
    $region12: #{visual_encoder_forward.1} parent=1 // pred_region
      _
    $region13: #{visual_encoder_forward.1} parent=1 // pred_fallthru
      _
    %v16 = vld [vmem:[%s0] sm:$0xff]
    %v17 = vld [vmem:[%s1] sm:$0xf]
    %v18 = vld [vmem:[%s1 + $0x4] sm:$0xf]
    %v19 = vld [vmem:[%s1 + $0x8] sm:$0xf]
    %v20 = vld [vmem:[%s1 + $0xc] sm:$0xf]
    %v21 = vld [vmem:[%s1 + $0x10] sm:$0xf]
    %v22 = vld [vmem:[%s1 + $0x14] sm:$0xf]
    %v23 = vld [vmem:[%s1 + $0x18] sm:$0xf]
    %v24 = vld [vmem:[%s1 + $0x1c] sm:$0xf]
    %v25 = vld [vmem:[%s1 + $0x20] sm:$0xf]
    %v26 = vld [vmem:[%s1 + $0x24] sm:$0xf]
    %v27 = vld [vmem:[%s1 + $0x28] sm:$0xf]
    %v28 = vld [vmem:[%s1 + $0x2c] sm:$0xf]
    %v29 = vld [vmem:[%s1 + $0x30] sm:$0xf]
    %v30 = vld [vmem:[%s1 + $0x34] sm:$0xf]
    %v31 = vld [vmem:[%s1 + $0x38] sm:$0xf]
    %v32 = vld [vmem:[%s1 + $0x3c] sm:$0xf]
    %v33 = vld [vmem:[%s1 + $0x40] sm:$0xf]
    %v34 = vld [vmem:[%s1 + $0x44] sm:$0xf]
    %v35 = vld [vmem:[%s1 + $0x48] sm:$0xf]
    %v36 = vld [vmem:[%s1 + $0x4c] sm:$0xf]
    %v37 = vld [vmem:[%s1 + $0x50] sm:$0xf]
    %v38 = vld [vmem:[%s1 + $0x54] sm:$0xf]
    %v39 = vld [vmem:[%s1 + $0x58] sm:$0xf]
    %v40 = vld [vmem:[%s1 + $0x5c] sm:$0xf]
    %v41 = vld [vmem:[%s1 + $0x60] sm:$0xf]
    %v42 = vld [vmem:[%s1 + $0x64] sm:$0xf]
    %v43 = vld [vmem:[%s1 + $0x68] sm:$0xf]
    %v44 = vld [vmem:[%s1 + $0x6c] sm:$0xf]
    %v45 = vld [vmem:[%s2] sm:$0xff]
    %v46 = vld [vmem:[%s2 + $0x8] sm:$0x3]
    %v47 = vld [vmem:[%s2 + $0x10] sm:$0xff]
    %v48 = vld [vmem:[%s2 + $0x18] sm:$0xff]
    %v49 = vld [vmem:[%s2 + $0x20] sm:$0xff]
    %v50 = vld [vmem:[%s2 + $0x28] sm:$0xff]
    %v51 = vld [vmem:[%s2 + $0x30] sm:$0xff]
    %v52 = vld [vmem:[%s2 + $0x38] sm:$0xff]
    %v53 = vld [vmem:[%s2 + $0x40] sm:$0xff]
    %v54 = vld [vmem:[%s2 + $0x48] sm:$0xff]
    %v55 = vld [vmem:[%s2 + $0x50] sm:$0xff]
    %v56 = vld [vmem:[%s2 + $0x58] sm:$0xff]
    %v57 = vld [vmem:[%s2 + $0x60] sm:$0xff]
    %v58 = vld [vmem:[%s2 + $0x68] sm:$0xff]
    %v59 = vld [vmem:[%s2 + $0x70] sm:$0xff]
    %v60 = vld [vmem:[%s2 + $0x78] sm:$0xff]
    %v61 = vld [vmem:[%s2 + $0x80] sm:$0xff]
    %v62 = vld [vmem:[%s2 + $0x88] sm:$0xff]
    %v63 = vld [vmem:[%s2 + $0x90] sm:$0x3]
    %v64 = vld [vmem:[%s2 + $0x98] sm:$0xff]
    %v65 = vld [vmem:[%s2 + $0xa0] sm:$0x3]
    %v66 = vld [vmem:[%s2 + $0xa8] sm:$0x3]
    %v67 = vld [vmem:[%s2 + $0xb0] sm:$0x1]
    %v68 = vld [vmem:[%s2 + $0xb1] sm:$0x1]
    %v69 = vld [vmem:[%s2 + $0xb2] sm:$0x1]
    %v71 = vunpack.c.l.b16 %v16
    %v72 = vunpack.c.h.b16 %v16
    %v73 = vpack.c.b16 %v71, %v71
    %v74 = vpack.c.b16 %v72, %v72
    %v100 = vunpack.c.l.b16 %v17
    %v101 = vunpack.c.l.b16 %v18
    %v102 = vunpack.c.l.b16 %v19
    %v103 = vunpack.c.l.b16 %v20
    %v104 = vunpack.c.l.b16 %v21
    %v105 = vunpack.c.l.b16 %v22
    %v106 = vunpack.c.l.b16 %v23
    %v107 = vunpack.c.l.b16 %v24
    %v108 = vunpack.c.l.b16 %v25
    %v109 = vunpack.c.l.b16 %v26
    %v110 = vunpack.c.l.b16 %v27
    %v111 = vunpack.c.l.b16 %v28
    %v112 = vunpack.c.l.b16 %v29
    %v113 = vunpack.c.l.b16 %v30
    %v114 = vunpack.c.l.b16 %v31
    %v115 = vunpack.c.l.b16 %v32
    %v116 = vunpack.c.l.b16 %v33
    %v117 = vunpack.c.l.b16 %v34
    %v118 = vunpack.c.l.b16 %v35
    %v119 = vunpack.c.l.b16 %v36
    %v120 = vunpack.c.l.b16 %v37
    %v121 = vunpack.c.l.b16 %v38
    %v122 = vunpack.c.l.b16 %v39
    %v123 = vunpack.c.l.b16 %v40
    %v124 = vpack.c.b16 %v101, %v100
    %v125 = vpack.c.b16 %v103, %v102
    %v126 = vpack.c.b16 %v105, %v104
    %v127 = vpack.c.b16 %v107, %v106
    %v128 = vpack.c.b16 %v109, %v108
    %v129 = vpack.c.b16 %v111, %v110
    %v130 = vpack.c.b16 %v113, %v112
    %v131 = vpack.c.b16 %v115, %v114
    %v132 = vpack.c.b16 %v117, %v116
    %v133 = vpack.c.b16 %v119, %v118
    %v134 = vpack.c.b16 %v121, %v120
    %v135 = vpack.c.b16 %v123, %v122
    %vm148 = vcmask 523264
    %v150 = vsel %vm148, %v74, 0
    %152 = vmatprep.subr.bf16.mxu0 0
    %153 = vmatpush1.bf16.msra.mxu0 %v124
    %154 = vmatprep.subr.bf16.mxu0 0
    %155 = vmatpush1.bf16.msra.mxu0 %v125
    %156 = vmatprep.subr.bf16.mxu0 0
    %157 = vmatpush1.bf16.msra.mxu0 %v126
    %158 = vmatprep.subr.bf16.mxu0 0
    %159 = vmatpush1.bf16.msra.mxu0 %v127
    %160 = vmatprep.subr.bf16.mxu0 0
    %161 = vmatpush1.bf16.msra.mxu0 %v128
    %162 = vmatprep.subr.bf16.mxu0 0
    %163 = vmatpush1.bf16.msra.mxu0 %v129
    %164 = vmatprep.subr.bf16.mxu0 0
    %165 = vmatpush1.bf16.msra.mxu0 %v130
    %166 = vmatprep.subr.bf16.mxu0 0
    %167 = vmatpush1.bf16.msra.mxu0 %v131
    %168 = vmatprep.subr.bf16.mxu0 0
    %169 = vmatpush1.bf16.msra.mxu0 %v132
    %170 = vmatprep.subr.bf16.mxu0 0
    %171 = vmatpush1.bf16.msra.mxu0 %v133
    %172 = vmatprep.subr.bf16.mxu0 0
    %173 = vmatpush1.bf16.msra.mxu0 %v134
    %174 = vmatprep.subr.bf16.mxu0 0
    %175 = vmatpush1.bf16.msra.mxu0 %v135
    %176 = vmatprep.subr.bf16.mxu0 0
    %177 = vmatpush1.bf16.msra.mxu0 0
    %178 = vmatprep.subr.bf16.mxu0 0
    %179 = vmatpush1.bf16.msra.mxu0 0
    %180 = vmatprep.subr.bf16.mxu0 0
    %181 = vmatpush1.bf16.msra.mxu0 0
    %182 = vmatprep.subr.bf16.mxu0 0
    %183 = vmatpush1.bf16.msra.mxu0 0
    %184 = vmatprep.mubr.bf16.mxu0 %v150
    %185 = vmatmul.mubr.bf16.gmra.mrb[0].mxu0 %v73
    %v186 = vpop.f32.mrb[0].mxu0
    %v187 = vadd.f32 0.0, %v186
    %v188 = vpop.f32.mrb[0].mxu0
    %v189 = vpop.f32.mrb[0].mxu0
    %v190 = vpop.f32.mrb[0].mxu0
    %191 = vdwg.mxu0
    %vm192 = vcmask 64512
    %v194 = vsel %vm192, %v64, 0
    %v197 = vsel %vm192, %v65, 0
    %199 = vmatprep.subr.mxu0 0.0
    %200 = vmatpush1.msra.mxu0 %v187
    %201 = vmatprep.subr.mxu0 0.0
    %202 = vmatpush1.msra.mxu0 0.0
    %203 = vmatprep.subr.mxu0 0.0
    %204 = vmatpush1.msra.mxu0 0.0
    %205 = vmatprep.subr.mxu0 0.0
    %206 = vmatpush1.msra.mxu0 0.0
    %207 = vmatprep.subr.mxu0 0.0
    %208 = vmatpush1.msra.mxu0 0.0
    %209 = vmatprep.subr.mxu0 0.0
    %210 = vmatpush1.msra.mxu0 0.0
    %211 = vmatprep.subr.mxu0 0.0
    %212 = vmatpush1.msra.mxu0 0.0
    %213 = vmatprep.subr.mxu0 0.0
    %214 = vmatpush1.msra.mxu0 0.0
    %215 = vmatprep.subr.mxu0 0.0
    %216 = vmatpush1.msra.mxu0 0.0
    %217 = vmatprep.subr.mxu0 0.0
    %218 = vmatpush1.msra.mxu0 0.0
    %219 = vmatprep.subr.mxu0 0.0
    %220 = vmatpush1.msra.mxu0 0.0
    %221 = vmatprep.subr.mxu0 0.0
    %222 = vmatpush1.msra.mxu0 0.0
    %223 = vmatprep.subr.mxu0 0.0
    %224 = vmatpush1.msra.mxu0 0.0
    %225 = vmatprep.subr.mxu0 0.0
    %226 = vmatpush1.msra.mxu0 0.0
    %227 = vmatprep.subr.mxu0 0.0
    %228 = vmatpush1.msra.mxu0 0.0
    %229 = vmatprep.subr.mxu0 0.0
    %230 = vmatpush1.msra.mxu0 0.0
    %231 = vmatprep.subr.mxu0 0.0
    %232 = vmatpush1.msra.mxu0 0.0
    %233 = vmatprep.subr.mxu0 0.0
    %234 = vmatpush1.msra.mxu0 0.0
    %235 = vmatprep.subr.mxu0 0.0
    %236 = vmatpush1.msra.mxu0 0.0
    %237 = vmatprep.subr.mxu0 0.0
    %238 = vmatpush1.msra.mxu0 0.0
    %239 = vmatprep.subr.mxu0 0.0
    %240 = vmatpush1.msra.mxu0 0.0
    %241 = vmatprep.subr.mxu0 0.0
    %242 = vmatpush1.msra.mxu0 0.0
    %243 = vmatprep.subr.mxu0 0.0
    %244 = vmatpush1.msra.mxu0 0.0
    %245 = vmatprep.subr.mxu0 0.0
    %246 = vmatpush1.msra.mxu0 0.0
    %247 = vmatprep.subr.mxu0 0.0
    %248 = vmatpush1.msra.mxu0 0.0
    %249 = vmatprep.subr.mxu0 0.0
    %250 = vmatpush1.msra.mxu0 0.0
    %251 = vmatprep.subr.mxu0 0.0
    %252 = vmatpush1.msra.mxu0 0.0
    %253 = vmatprep.subr.mxu0 0.0
    %254 = vmatpush1.msra.mxu0 0.0
    %255 = vmatprep.subr.mxu0 0.0
    %256 = vmatpush1.msra.mxu0 0.0
    %257 = vmatprep.subr.mxu0 0.0
    %258 = vmatpush1.msra.mxu0 0.0
    %259 = vmatprep.subr.mxu0 0.0
    %260 = vmatpush1.msra.mxu0 0.0
    %261 = vmatprep.subr.mxu0 0.0
    %262 = vmatpush1.msra.mxu0 0.0
    %263 = vmatprep.mubr.f32.mxu0 0.0
    %264 = vmatmul.mubr.f32.gmra.mrb[0].mxu0 %v194
    %v265 = vpop.f32.mrb[0].mxu0
    %v266 = vadd.f32 %v45, %v265
    %v267 = vpop.f32.mrb[0].mxu0
    %268 = vmatprep.mubr.f32.mxu0 0.0
    %269 = vmatmul.mubr.f32.gmra.mrb[0].mxu0 %v197
    %v270 = vpop.f32.mrb[0].mxu0
    %v271 = vadd.f32 %v46, %v270
    %v272 = vpop.f32.mrb[0].mxu0
    %273 = vdwg.mxu0
    %v274 = vld [vmem:[%s1 + $0x70] sm:$0xf]
    %v275 = vld [vmem:[%s1 + $0x74] sm:$0xf]
    %v276 = vld [vmem:[%s1 + $0x78] sm:$0xf]
    %v277 = vld [vmem:[%s1 + $0x7c] sm:$0xf]
    %v278 = vld [vmem:[%s1 + $0x80] sm:$0xf]
    %v279 = vld [vmem:[%s1 + $0x84] sm:$0xf]
    %v280 = vld [vmem:[%s1 + $0x88] sm:$0xf]
    %v281 = vld [vmem:[%s1 + $0x8c] sm:$0xf]
    %v282 = vld [vmem:[%s1 + $0x90] sm:$0xf]
    %v283 = vld [vmem:[%s1 + $0x94] sm:$0xf]
    %v284 = vld [vmem:[%s1 + $0x98] sm:$0xf]
    %v285 = vld [vmem:[%s1 + $0x9c] sm:$0xf]
    %v286 = vld [vmem:[%s1 + $0xa0] sm:$0xf]
    %v287 = vld [vmem:[%s1 + $0xa4] sm:$0xf]
    %v288 = vld [vmem:[%s1 + $0xa8] sm:$0xf]
    %v289 = vld [vmem:[%s1 + $0xac] sm:$0xf]
    %v290 = vld [vmem:[%s1 + $0xb0] sm:$0xf]
    %v291 = vld [vmem:[%s1 + $0xb4] sm:$0xf]
    %v292 = vld [vmem:[%s1 + $0xb8] sm:$0xf]
    %v293 = vld [vmem:[%s1 + $0xbc] sm:$0xf]
    %v294 = vld [vmem:[%s2 + $0xb8] sm:$0x1]
    %v295 = vld [vmem:[%s2 + $0xb9] sm:$0x1]
    %v296 = vld [vmem:[%s2 + $0xba] sm:$0x1]
    %v297 = vld [vmem:[%s2 + $0xbb] sm:$0x1]
    %v298 = vld [vmem:[%s2 + $0xbc] sm:$0x1]
    %v299 = vld [vmem:[%s2 + $0xbd] sm:$0x1]
    %v300 = vld [vmem:[%s2 + $0xbe] sm:$0x1]
    %v301 = vld [vmem:[%s2 + $0xbf] sm:$0x1]
    %vm302 = vcmask 261120
    %v303 = vsel %vm302, %v266, 0.0
    %304 = vadd.xlane.f32.xlu0 %v303
    %v305 = vpop.xlane.xlu0 %304
    %vm306 = vcmask 254976
    %v307 = vsel %vm306, %v271, 0.0
    %308 = vadd.xlane.f32.xlu0 %v307
    %v309 = vpop.xlane.xlu0 %308
    %v310 = vrcp.pop 32.0
    %v311 = vmul.f32 %v305, %v310
    %v312 = vmul.f32 %v309, %v310
    %v313 = vsub.f32 %v266, %v311
    %v314 = vsub.f32 %v271, %v312
    %v315 = vmul.f32 %v313, %v313
    %v316 = vmul.f32 %v314, %v314
    %v317 = vsel %vm302, %v315, 0.0
    %318 = vadd.xlane.f32.xlu0 %v317
    %v319 = vpop.xlane.xlu0 %318
    %v320 = vsel %vm306, %v316, 0.0
    %321 = vadd.xlane.f32.xlu0 %v320
    %v322 = vpop.xlane.xlu0 %321
    %v323 = vmul.f32 %v319, %v310
    %v324 = vmul.f32 %v322, %v310
    %v325 = vadd.f32 %v323, 1e-12
    %v326 = vadd.f32 %v324, 1e-12
    %v327 = vrsqrt.pop %v325
    %v328 = vrsqrt.pop %v326
    %v329 = vmul.f32 %v313, %v327
    %v330 = vmul.f32 %v314, %v328
    %v331 = vlaneseq
    %v332 = vshrl.u32 %v331, 7
    %v333 = vsub.s32 0, %v332
    %v334 = vrot.slane %v294, %v333
    %v335 = vmul.f32 %v329, %v334
    %v336 = vmul.f32 %v330, %v334
    %v337 = vlaneseq
    %v338 = vshrl.u32 %v337, 7
    %v339 = vsub.s32 0, %v338
    %v340 = vrot.slane %v295, %v339
    %v341 = vadd.f32 %v335, %v340
    %v342 = vadd.f32 %v336, %v340
    %v343 = vpack.c.bf16 %v342, %v341
    %v344 = vlaneseq
    %v345 = vshrl.u32 %v344, 7
    %v346 = vsub.s32 0, %v345
    %v347 = vrot.slane %v298, %v346
    %v352 = vunpack.c.l.b16 %v274
    %v353 = vunpack.c.l.b16 %v275
    %v354 = vunpack.c.l.b16 %v276
    %v355 = vunpack.c.l.b16 %v277
    %v356 = vpack.c.b16 %v353, %v352
    %v357 = vpack.c.b16 %v355, %v354
    %v361 = vsel %vm302, %v343, 0
    %363 = vmatprep.subr.bf16.mxu0 0
    %364 = vmatpush1.bf16.msra.mxu0 %v356
    %365 = vmatprep.subr.bf16.mxu0 0
    %366 = vmatpush1.bf16.msra.mxu0 %v357
    %367 = vmatprep.subr.bf16.mxu0 0
    %368 = vmatpush1.bf16.msra.mxu0 0
    %369 = vmatprep.subr.bf16.mxu0 0
    %370 = vmatpush1.bf16.msra.mxu0 0
    %371 = vmatprep.subr.bf16.mxu0 0
    %372 = vmatpush1.bf16.msra.mxu0 0
    %373 = vmatprep.subr.bf16.mxu0 0
    %374 = vmatpush1.bf16.msra.mxu0 0
    %375 = vmatprep.subr.bf16.mxu0 0
    %376 = vmatpush1.bf16.msra.mxu0 0
    %377 = vmatprep.subr.bf16.mxu0 0
    %378 = vmatpush1.bf16.msra.mxu0 0
    %379 = vmatprep.subr.bf16.mxu0 0
    %380 = vmatpush1.bf16.msra.mxu0 0
    %381 = vmatprep.subr.bf16.mxu0 0
    %382 = vmatpush1.bf16.msra.mxu0 0
    %383 = vmatprep.subr.bf16.mxu0 0
    %384 = vmatpush1.bf16.msra.mxu0 0
    %385 = vmatprep.subr.bf16.mxu0 0
    %386 = vmatpush1.bf16.msra.mxu0 0
    %387 = vmatprep.subr.bf16.mxu0 0
    %388 = vmatpush1.bf16.msra.mxu0 0
    %389 = vmatprep.subr.bf16.mxu0 0
    %390 = vmatpush1.bf16.msra.mxu0 0
    %391 = vmatprep.subr.bf16.mxu0 0
    %392 = vmatpush1.bf16.msra.mxu0 0
    %393 = vmatprep.subr.bf16.mxu0 0
    %394 = vmatpush1.bf16.msra.mxu0 0
    %395 = vmatprep.mubr.bf16.mxu0 0
    %396 = vmatmul.mubr.bf16.gmra.mrb[0].mxu0 %v361
    %v397 = vpop.f32.mrb[0].mxu0
    %v398 = vadd.f32 %v347, %v397
    %v399 = vpop.f32.mrb[0].mxu0
    %v400 = vpop.f32.mrb[0].mxu0
    %v401 = vadd.f32 %v347, %v400
    %v402 = vpop.f32.mrb[0].mxu0
    %403 = vdwg.mxu0
    %v404 = vmul.f32 %v398, 0.35355338
    %v405 = vmul.f32 %v401, 0.35355338
    %vm406 = vcmask 80896
    %v408 = vsel %vm406, %v57, 0
    %v411 = vsel %vm406, %v58, 0
    %v414 = vsel %vm406, %v59, 0
    %v417 = vsel %vm406, %v60, 0
    %v420 = vsel %vm406, %v61, 0
    %vm422 = vcmask 1041408
    %v424 = vsel %vm422, %v405, 0
    %426 = vmatprep.subr.mxu0 0.0
    %427 = vmatpush1.msra.mxu0 %v404
    %428 = vmatprep.subr.mxu0 0.0
    %429 = vmatpush1.msra.mxu0 %v424
    %430 = vmatprep.subr.mxu0 0.0
    %431 = vmatpush1.msra.mxu0 0.0
    %432 = vmatprep.subr.mxu0 0.0
    %433 = vmatpush1.msra.mxu0 0.0
    %434 = vmatprep.subr.mxu0 0.0
    %435 = vmatpush1.msra.mxu0 0.0
    %436 = vmatprep.subr.mxu0 0.0
    %437 = vmatpush1.msra.mxu0 0.0
    %438 = vmatprep.subr.mxu0 0.0
    %439 = vmatpush1.msra.mxu0 0.0
    %440 = vmatprep.subr.mxu0 0.0
    %441 = vmatpush1.msra.mxu0 0.0
    %442 = vmatprep.subr.mxu0 0.0
    %443 = vmatpush1.msra.mxu0 0.0
    %444 = vmatprep.subr.mxu0 0.0
    %445 = vmatpush1.msra.mxu0 0.0
    %446 = vmatprep.subr.mxu0 0.0
    %447 = vmatpush1.msra.mxu0 0.0
    %448 = vmatprep.subr.mxu0 0.0
    %449 = vmatpush1.msra.mxu0 0.0
    %450 = vmatprep.subr.mxu0 0.0
    %451 = vmatpush1.msra.mxu0 0.0
    %452 = vmatprep.subr.mxu0 0.0
    %453 = vmatpush1.msra.mxu0 0.0
    %454 = vmatprep.subr.mxu0 0.0
    %455 = vmatpush1.msra.mxu0 0.0
    %456 = vmatprep.subr.mxu0 0.0
    %457 = vmatpush1.msra.mxu0 0.0
    %458 = vmatprep.subr.mxu0 0.0
    %459 = vmatpush1.msra.mxu0 0.0
    %460 = vmatprep.subr.mxu0 0.0
    %461 = vmatpush1.msra.mxu0 0.0
    %462 = vmatprep.subr.mxu0 0.0
    %463 = vmatpush1.msra.mxu0 0.0
    %464 = vmatprep.subr.mxu0 0.0
    %465 = vmatpush1.msra.mxu0 0.0
    %466 = vmatprep.subr.mxu0 0.0
    %467 = vmatpush1.msra.mxu0 0.0
    %468 = vmatprep.subr.mxu0 0.0
    %469 = vmatpush1.msra.mxu0 0.0
    %470 = vmatprep.subr.mxu0 0.0
    %471 = vmatpush1.msra.mxu0 0.0
    %472 = vmatprep.subr.mxu0 0.0
    %473 = vmatpush1.msra.mxu0 0.0
    %474 = vmatprep.subr.mxu0 0.0
    %475 = vmatpush1.msra.mxu0 0.0
    %476 = vmatprep.subr.mxu0 0.0
    %477 = vmatpush1.msra.mxu0 0.0
    %478 = vmatprep.subr.mxu0 0.0
    %479 = vmatpush1.msra.mxu0 0.0
    %480 = vmatprep.subr.mxu0 0.0
    %481 = vmatpush1.msra.mxu0 0.0
    %482 = vmatprep.subr.mxu0 0.0
    %483 = vmatpush1.msra.mxu0 0.0
    %484 = vmatprep.subr.mxu0 0.0
    %485 = vmatpush1.msra.mxu0 0.0
    %486 = vmatprep.subr.mxu0 0.0
    %487 = vmatpush1.msra.mxu0 0.0
    %488 = vmatprep.subr.mxu0 0.0
    %489 = vmatpush1.msra.mxu0 0.0
    %490 = vmatprep.mubr.f32.mxu0 0.0
    %491 = vmatmul.mubr.f32.gmra.mrb[0].mxu0 %v408
    %v492 = vpop.f32.mrb[0].mxu0
    %v493 = vadd.f32 0.0, %v492
    %v494 = vpop.f32.mrb[0].mxu0
    %495 = vmatprep.mubr.f32.mxu0 0.0
    %496 = vmatmul.mubr.f32.gmra.mrb[0].mxu0 %v411
    %v497 = vpop.f32.mrb[0].mxu0
    %v498 = vadd.f32 0.0, %v497
    %v499 = vpop.f32.mrb[0].mxu0
    %500 = vmatprep.mubr.f32.mxu0 0.0
    %501 = vmatmul.mubr.f32.gmra.mrb[0].mxu0 %v414
    %v502 = vpop.f32.mrb[0].mxu0
    %v503 = vadd.f32 0.0, %v502
    %v504 = vpop.f32.mrb[0].mxu0
    %505 = vmatprep.mubr.f32.mxu0 0.0
    %506 = vmatmul.mubr.f32.gmra.mrb[0].mxu0 %v417
    %v507 = vpop.f32.mrb[0].mxu0
    %v508 = vadd.f32 0.0, %v507
    %v509 = vpop.f32.mrb[0].mxu0
    %510 = vmatprep.mubr.f32.mxu0 0.0
    %511 = vmatmul.mubr.f32.gmra.mrb[0].mxu0 %v420
    %v512 = vpop.f32.mrb[0].mxu0
    %v513 = vadd.f32 0.0, %v512
    %v514 = vpop.f32.mrb[0].mxu0
    %515 = vdwg.mxu0
    %v516 = vmul.f32 %v493, %v47
    %v517 = vmul.f32 %v498, %v48
    %v518 = vmul.f32 %v503, %v49
    %v519 = vmul.f32 %v508, %v50
    %v520 = vmul.f32 %v513, %v51
    %v521 = vpack.c.bf16 %v517, %v516
    %v522 = vpack.c.bf16 %v519, %v518
    %v523 = vpack.c.bf16 %v520, %v520
    %v524 = vpack.c.bf16 %v401, %v398
    %526 = vrot.lane.b32.xlu0 %v524, 96
    %v527 = vpop.permute.xlu0 %526
    %v529 = vsel %vm302, %v521, 0
    %v532 = vsel %vm302, %v522, 0
    %v535 = vsel %vm302, %v523, 0
    %v538 = vsel %vm302, %v527, 0
    %540 = vmatprep.subr.bf16.mxu0 0
    %541 = vmatpush1.bf16.xpose.msra.mxu0 %v538
    %542 = vmatprep.subr.bf16.mxu0 0
    %543 = vmatpush1.bf16.xpose.msra.mxu0 0
    %544 = vmatprep.subr.bf16.mxu0 0
    %545 = vmatpush1.bf16.xpose.msra.mxu0 0
    %546 = vmatprep.subr.bf16.mxu0 0
    %547 = vmatpush1.bf16.xpose.msra.mxu0 0
    %548 = vmatprep.subr.bf16.mxu0 0
    %549 = vmatpush1.bf16.xpose.msra.mxu0 0
    %550 = vmatprep.subr.bf16.mxu0 0
    %551 = vmatpush1.bf16.xpose.msra.mxu0 0
    %552 = vmatprep.subr.bf16.mxu0 0
    %553 = vmatpush1.bf16.xpose.msra.mxu0 0
    %554 = vmatprep.subr.bf16.mxu0 0
    %555 = vmatpush1.bf16.xpose.msra.mxu0 0
    %556 = vmatprep.subr.bf16.mxu0 0
    %557 = vmatpush1.bf16.xpose.msra.mxu0 0
    %558 = vmatprep.subr.bf16.mxu0 0
    %559 = vmatpush1.bf16.xpose.msra.mxu0 0
    %560 = vmatprep.subr.bf16.mxu0 0
    %561 = vmatpush1.bf16.xpose.msra.mxu0 0
    %562 = vmatprep.subr.bf16.mxu0 0
    %563 = vmatpush1.bf16.xpose.msra.mxu0 0
    %564 = vmatprep.subr.bf16.mxu0 0
    %565 = vmatpush1.bf16.xpose.msra.mxu0 0
    %566 = vmatprep.subr.bf16.mxu0 0
    %567 = vmatpush1.bf16.xpose.msra.mxu0 0
    %568 = vmatprep.subr.bf16.mxu0 0
    %569 = vmatpush1.bf16.xpose.msra.mxu0 0
    %570 = vmatprep.subr.bf16.mxu0 0
    %571 = vmatpush1.bf16.xpose.msra.mxu0 0
    %572 = vmatprep.mubr.bf16.mxu0 0
    %573 = vmatmul.mubr.bf16.gmra.mrb[0].mxu0 %v529
    %v574 = vpop.f32.mrb[0].mxu0
    %v575 = vadd.f32 %v52, %v574
    %v576 = vpop.f32.mrb[0].mxu0
    %v577 = vpop.f32.mrb[0].mxu0
    %v578 = vadd.f32 %v53, %v577
    %v579 = vpop.f32.mrb[0].mxu0
    %580 = vmatprep.mubr.bf16.mxu0 0
    %581 = vmatmul.mubr.bf16.gmra.mrb[0].mxu0 %v532
    %v582 = vpop.f32.mrb[0].mxu0
    %v583 = vadd.f32 %v54, %v582
    %v584 = vpop.f32.mrb[0].mxu0
    %v585 = vpop.f32.mrb[0].mxu0
    %v586 = vadd.f32 %v55, %v585
    %v587 = vpop.f32.mrb[0].mxu0
    %588 = vmatprep.mubr.bf16.mxu0 0
    %589 = vmatmul.mubr.bf16.gmra.mrb[0].mxu0 %v535
    %v590 = vpop.f32.mrb[0].mxu0
    %v591 = vadd.f32 %v56, %v590
    %v592 = vpop.f32.mrb[0].mxu0
    %v593 = vpop.f32.mrb[0].mxu0
    %v594 = vpop.f32.mrb[0].mxu0
    %595 = vdwg.mxu0
    %v596 = vsel %vm406, %v575, -inf
    %597 = vmax.xlane.f32.xlu0 %v596
    %v598 = vpop.xlane.xlu0 %597
    %v599 = vsel %vm406, %v578, -inf
    %600 = vmax.xlane.f32.xlu0 %v599
    %v601 = vpop.xlane.xlu0 %600
    %v602 = vsel %vm406, %v583, -inf
    %603 = vmax.xlane.f32.xlu0 %v602
    %v604 = vpop.xlane.xlu0 %603
    %v605 = vsel %vm406, %v586, -inf
    %606 = vmax.xlane.f32.xlu0 %v605
    %v607 = vpop.xlane.xlu0 %606
    %v608 = vsel %vm406, %v591, -inf
    %609 = vmax.xlane.f32.xlu0 %v608
    %v610 = vpop.xlane.xlu0 %609
    %v611 = vsub.f32 %v575, %v598
    %v612 = vsub.f32 %v578, %v601
    %v613 = vsub.f32 %v583, %v604
    %v614 = vsub.f32 %v586, %v607
    %v615 = vsub.f32 %v591, %v610
    %v616 = vmul.f32 %v611, 1.442695
    %v617 = vpow.pop %v616
    %v618 = vmul.f32 %v612, 1.442695
    %v619 = vpow.pop %v618
    %v620 = vmul.f32 %v613, 1.442695
    %v621 = vpow.pop %v620
    %v622 = vmul.f32 %v614, 1.442695
    %v623 = vpow.pop %v622
    %v624 = vmul.f32 %v615, 1.442695
    %v625 = vpow.pop %v624
    %v626 = vsel %vm406, %v617, 0.0
    %627 = vadd.xlane.f32.xlu0 %v626
    %v628 = vpop.xlane.xlu0 %627
    %v629 = vsel %vm406, %v619, 0.0
    %630 = vadd.xlane.f32.xlu0 %v629
    %v631 = vpop.xlane.xlu0 %630
    %v632 = vsel %vm406, %v621, 0.0
    %633 = vadd.xlane.f32.xlu0 %v632
    %v634 = vpop.xlane.xlu0 %633
    %v635 = vsel %vm406, %v623, 0.0
    %636 = vadd.xlane.f32.xlu0 %v635
    %v637 = vpop.xlane.xlu0 %636
    %v638 = vsel %vm406, %v625, 0.0
    %639 = vadd.xlane.f32.xlu0 %v638
    %v640 = vpop.xlane.xlu0 %639
    %v641 = vrcp.pop %v628
    %v642 = vrcp.pop %v631
    %v643 = vrcp.pop %v634
    %v644 = vrcp.pop %v637
    %v645 = vrcp.pop %v640
    %v646 = vmul.f32 %v617, %v641
    %v647 = vmul.f32 %v619, %v642
    %v648 = vmul.f32 %v621, %v643
    %v649 = vmul.f32 %v623, %v644
    %v650 = vmul.f32 %v625, %v645
    %v651 = vpack.c.bf16 %v647, %v646
    %v652 = vpack.c.bf16 %v649, %v648
    %v653 = vpack.c.bf16 %v650, %v650
    %654 = vrot.lane.b32.xlu0 %v524, 64
    %v655 = vpop.permute.xlu0 %654
    %v657 = vsel %vm406, %v651, 0
    %v660 = vsel %vm406, %v652, 0
    %v663 = vsel %vm406, %v653, 0
    %vm665 = vcmask 1044480
    %v667 = vsel %vm665, %v655, 0
    %669 = vmatprep.subr.bf16.mxu0 0
    %670 = vmatpush1.bf16.msra.mxu0 %v667
    %671 = vmatprep.subr.bf16.mxu0 0
    %672 = vmatpush1.bf16.msra.mxu0 0
    %673 = vmatprep.subr.bf16.mxu0 0
    %674 = vmatpush1.bf16.msra.mxu0 0
    %675 = vmatprep.subr.bf16.mxu0 0
    %676 = vmatpush1.bf16.msra.mxu0 0
    %677 = vmatprep.subr.bf16.mxu0 0
    %678 = vmatpush1.bf16.msra.mxu0 0
    %679 = vmatprep.subr.bf16.mxu0 0
    %680 = vmatpush1.bf16.msra.mxu0 0
    %681 = vmatprep.subr.bf16.mxu0 0
    %682 = vmatpush1.bf16.msra.mxu0 0
    %683 = vmatprep.subr.bf16.mxu0 0
    %684 = vmatpush1.bf16.msra.mxu0 0
    %685 = vmatprep.subr.bf16.mxu0 0
    %686 = vmatpush1.bf16.msra.mxu0 0
    %687 = vmatprep.subr.bf16.mxu0 0
    %688 = vmatpush1.bf16.msra.mxu0 0
    %689 = vmatprep.subr.bf16.mxu0 0
    %690 = vmatpush1.bf16.msra.mxu0 0
    %691 = vmatprep.subr.bf16.mxu0 0
    %692 = vmatpush1.bf16.msra.mxu0 0
    %693 = vmatprep.subr.bf16.mxu0 0
    %694 = vmatpush1.bf16.msra.mxu0 0
    %695 = vmatprep.subr.bf16.mxu0 0
    %696 = vmatpush1.bf16.msra.mxu0 0
    %697 = vmatprep.subr.bf16.mxu0 0
    %698 = vmatpush1.bf16.msra.mxu0 0
    %699 = vmatprep.subr.bf16.mxu0 0
    %700 = vmatpush1.bf16.msra.mxu0 0
    %701 = vmatprep.mubr.bf16.mxu0 0
    %702 = vmatmul.mubr.bf16.gmra.mrb[0].mxu0 %v657
    %v703 = vpop.f32.mrb[0].mxu0
    %v704 = vadd.f32 0.0, %v703
    %v705 = vpop.f32.mrb[0].mxu0
    %v706 = vpop.f32.mrb[0].mxu0
    %v707 = vadd.f32 0.0, %v706
    %v708 = vpop.f32.mrb[0].mxu0
    %709 = vmatprep.mubr.bf16.mxu0 0
    %710 = vmatmul.mubr.bf16.gmra.mrb[0].mxu0 %v660
    %v711 = vpop.f32.mrb[0].mxu0
    %v712 = vadd.f32 0.0, %v711
    %v713 = vpop.f32.mrb[0].mxu0
    %v714 = vpop.f32.mrb[0].mxu0
    %v715 = vadd.f32 0.0, %v714
    %v716 = vpop.f32.mrb[0].mxu0
    %717 = vmatprep.mubr.bf16.mxu0 0
    %718 = vmatmul.mubr.bf16.gmra.mrb[0].mxu0 %v663
    %v719 = vpop.f32.mrb[0].mxu0
    %v720 = vadd.f32 0.0, %v719
    %v721 = vpop.f32.mrb[0].mxu0
    %v722 = vpop.f32.mrb[0].mxu0
    %v723 = vpop.f32.mrb[0].mxu0
    %724 = vdwg.mxu0
    %v725 = vmul.f32 %v704, %v47
    %v726 = vmul.f32 %v707, %v48
    %v727 = vmul.f32 %v712, %v49
    %v728 = vmul.f32 %v715, %v50
    %v729 = vmul.f32 %v720, %v51
    %vm730 = vcmask 326656
    %v732 = vsel %vm730, %v62, 0
    %v735 = vsel %vm730, %v63, 0
    %737 = vmatprep.subr.mxu0 0.0
    %738 = vmatpush1.msra.mxu0 %v725
    %739 = vmatprep.subr.mxu0 0.0
    %740 = vmatpush1.msra.mxu0 %v726
    %741 = vmatprep.subr.mxu0 0.0
    %742 = vmatpush1.msra.mxu0 %v727
    %743 = vmatprep.subr.mxu0 0.0
    %744 = vmatpush1.msra.mxu0 %v728
    %745 = vmatprep.subr.mxu0 0.0
    %746 = vmatpush1.msra.mxu0 %v729
    %747 = vmatprep.subr.mxu0 0.0
    %748 = vmatpush1.msra.mxu0 0.0
    %749 = vmatprep.subr.mxu0 0.0
    %750 = vmatpush1.msra.mxu0 0.0
    %751 = vmatprep.subr.mxu0 0.0
    %752 = vmatpush1.msra.mxu0 0.0
    %753 = vmatprep.subr.mxu0 0.0
    %754 = vmatpush1.msra.mxu0 0.0
    %755 = vmatprep.subr.mxu0 0.0
    %756 = vmatpush1.msra.mxu0 0.0
    %757 = vmatprep.subr.mxu0 0.0
    %758 = vmatpush1.msra.mxu0 0.0
    %759 = vmatprep.subr.mxu0 0.0
    %760 = vmatpush1.msra.mxu0 0.0
    %761 = vmatprep.subr.mxu0 0.0
    %762 = vmatpush1.msra.mxu0 0.0
    %763 = vmatprep.subr.mxu0 0.0
    %764 = vmatpush1.msra.mxu0 0.0
    %765 = vmatprep.subr.mxu0 0.0
    %766 = vmatpush1.msra.mxu0 0.0
    %767 = vmatprep.subr.mxu0 0.0
    %768 = vmatpush1.msra.mxu0 0.0
    %769 = vmatprep.subr.mxu0 0.0
    %770 = vmatpush1.msra.mxu0 0.0
    %771 = vmatprep.subr.mxu0 0.0
    %772 = vmatpush1.msra.mxu0 0.0
    %773 = vmatprep.subr.mxu0 0.0
    %774 = vmatpush1.msra.mxu0 0.0
    %775 = vmatprep.subr.mxu0 0.0
    %776 = vmatpush1.msra.mxu0 0.0
    %777 = vmatprep.subr.mxu0 0.0
    %778 = vmatpush1.msra.mxu0 0.0
    %779 = vmatprep.subr.mxu0 0.0
    %780 = vmatpush1.msra.mxu0 0.0
    %781 = vmatprep.subr.mxu0 0.0
    %782 = vmatpush1.msra.mxu0 0.0
    %783 = vmatprep.subr.mxu0 0.0
    %784 = vmatpush1.msra.mxu0 0.0
    %785 = vmatprep.subr.mxu0 0.0
    %786 = vmatpush1.msra.mxu0 0.0
    %787 = vmatprep.subr.mxu0 0.0
    %788 = vmatpush1.msra.mxu0 0.0
    %789 = vmatprep.subr.mxu0 0.0
    %790 = vmatpush1.msra.mxu0 0.0
    %791 = vmatprep.subr.mxu0 0.0
    %792 = vmatpush1.msra.mxu0 0.0
    %793 = vmatprep.subr.mxu0 0.0
    %794 = vmatpush1.msra.mxu0 0.0
    %795 = vmatprep.subr.mxu0 0.0
    %796 = vmatpush1.msra.mxu0 0.0
    %797 = vmatprep.subr.mxu0 0.0
    %798 = vmatpush1.msra.mxu0 0.0
    %799 = vmatprep.subr.mxu0 0.0
    %800 = vmatpush1.msra.mxu0 0.0
    %801 = vmatprep.mubr.f32.mxu0 0.0
    %802 = vmatmul.mubr.f32.gmra.mrb[0].mxu0 %v732
    %v803 = vpop.f32.mrb[0].mxu0
    %v804 = vadd.f32 0.0, %v803
    %v805 = vpop.f32.mrb[0].mxu0
    %806 = vmatprep.mubr.f32.mxu0 0.0
    %807 = vmatmul.mubr.f32.gmra.mrb[0].mxu0 %v735
    %v808 = vpop.f32.mrb[0].mxu0
    %v809 = vadd.f32 0.0, %v808
    %v810 = vpop.f32.mrb[0].mxu0
    %811 = vdwg.mxu0
    %v812 = vpack.c.bf16 %v809, %v804
    %v813 = vlaneseq
    %v814 = vshrl.u32 %v813, 7
    %v815 = vsub.s32 0, %v814
    %v816 = vrot.slane %v299, %v815
    %v821 = vunpack.c.l.b16 %v278
    %v822 = vunpack.c.l.b16 %v279
    %v823 = vunpack.c.l.b16 %v280
    %v824 = vunpack.c.l.b16 %v281
    %v825 = vpack.c.b16 %v822, %v821
    %v826 = vpack.c.b16 %v824, %v823
    %v830 = vsel %vm302, %v812, 0
    %832 = vmatprep.subr.bf16.mxu0 0
    %833 = vmatpush1.bf16.msra.mxu0 %v825
    %834 = vmatprep.subr.bf16.mxu0 0
    %835 = vmatpush1.bf16.msra.mxu0 %v826
    %836 = vmatprep.subr.bf16.mxu0 0
    %837 = vmatpush1.bf16.msra.mxu0 0
    %838 = vmatprep.subr.bf16.mxu0 0
    %839 = vmatpush1.bf16.msra.mxu0 0
    %840 = vmatprep.subr.bf16.mxu0 0
    %841 = vmatpush1.bf16.msra.mxu0 0
    %842 = vmatprep.subr.bf16.mxu0 0
    %843 = vmatpush1.bf16.msra.mxu0 0
    %844 = vmatprep.subr.bf16.mxu0 0
    %845 = vmatpush1.bf16.msra.mxu0 0
    %846 = vmatprep.subr.bf16.mxu0 0
    %847 = vmatpush1.bf16.msra.mxu0 0
    %848 = vmatprep.subr.bf16.mxu0 0
    %849 = vmatpush1.bf16.msra.mxu0 0
    %850 = vmatprep.subr.bf16.mxu0 0
    %851 = vmatpush1.bf16.msra.mxu0 0
    %852 = vmatprep.subr.bf16.mxu0 0
    %853 = vmatpush1.bf16.msra.mxu0 0
    %854 = vmatprep.subr.bf16.mxu0 0
    %855 = vmatpush1.bf16.msra.mxu0 0
    %856 = vmatprep.subr.bf16.mxu0 0
    %857 = vmatpush1.bf16.msra.mxu0 0
    %858 = vmatprep.subr.bf16.mxu0 0
    %859 = vmatpush1.bf16.msra.mxu0 0
    %860 = vmatprep.subr.bf16.mxu0 0
    %861 = vmatpush1.bf16.msra.mxu0 0
    %862 = vmatprep.subr.bf16.mxu0 0
    %863 = vmatpush1.bf16.msra.mxu0 0
    %864 = vmatprep.mubr.bf16.mxu0 0
    %865 = vmatmul.mubr.bf16.gmra.mrb[0].mxu0 %v830
    %v866 = vpop.f32.mrb[0].mxu0
    %v867 = vadd.f32 %v816, %v866
    %v868 = vpop.f32.mrb[0].mxu0
    %v869 = vpop.f32.mrb[0].mxu0
    %v870 = vadd.f32 %v816, %v869
    %v871 = vpop.f32.mrb[0].mxu0
    %872 = vdwg.mxu0
    %v873 = vadd.f32 %v266, %v867
    %v874 = vadd.f32 %v271, %v870
    %v875 = vsel %vm302, %v873, 0.0
    %876 = vadd.xlane.f32.xlu0 %v875
    %v877 = vpop.xlane.xlu0 %876
    %v878 = vsel %vm306, %v874, 0.0
    %879 = vadd.xlane.f32.xlu0 %v878
    %v880 = vpop.xlane.xlu0 %879
    %v881 = vmul.f32 %v877, %v310
    %v882 = vmul.f32 %v880, %v310
    %v883 = vsub.f32 %v873, %v881
    %v884 = vsub.f32 %v874, %v882
    %v885 = vmul.f32 %v883, %v883
    %v886 = vmul.f32 %v884, %v884
    %v887 = vsel %vm302, %v885, 0.0
    %888 = vadd.xlane.f32.xlu0 %v887
    %v889 = vpop.xlane.xlu0 %888
    %v890 = vsel %vm306, %v886, 0.0
    %891 = vadd.xlane.f32.xlu0 %v890
    %v892 = vpop.xlane.xlu0 %891
    %v893 = vmul.f32 %v889, %v310
    %v894 = vmul.f32 %v892, %v310
    %v895 = vadd.f32 %v893, 1e-12
    %v896 = vadd.f32 %v894, 1e-12
    %v897 = vrsqrt.pop %v895
    %v898 = vrsqrt.pop %v896
    %v899 = vmul.f32 %v883, %v897
    %v900 = vmul.f32 %v884, %v898
    %v901 = vlaneseq
    %v902 = vshrl.u32 %v901, 7
    %v903 = vsub.s32 0, %v902
    %v904 = vrot.slane %v296, %v903
    %v905 = vmul.f32 %v899, %v904
    %v906 = vmul.f32 %v900, %v904
    %v907 = vlaneseq
    %v908 = vshrl.u32 %v907, 7
    %v909 = vsub.s32 0, %v908
    %v910 = vrot.slane %v297, %v909
    %v911 = vadd.f32 %v905, %v910
    %v912 = vadd.f32 %v906, %v910
    %v913 = vpack.c.bf16 %v912, %v911
    %v914 = vlaneseq
    %v915 = vshrl.u32 %v914, 7
    %v916 = vsub.s32 0, %v915
    %v917 = vrot.slane %v300, %v916
    %v922 = vunpack.c.l.b16 %v282
    %v923 = vunpack.c.l.b16 %v283
    %v924 = vunpack.c.l.b16 %v284
    %v925 = vunpack.c.l.b16 %v285
    %v926 = vpack.c.b16 %v923, %v922
    %v927 = vpack.c.b16 %v925, %v924
    %v931 = vsel %vm302, %v913, 0
    %933 = vmatprep.subr.bf16.mxu0 0
    %934 = vmatpush1.bf16.msra.mxu0 %v926
    %935 = vmatprep.subr.bf16.mxu0 0
    %936 = vmatpush1.bf16.msra.mxu0 %v927
    %937 = vmatprep.subr.bf16.mxu0 0
    %938 = vmatpush1.bf16.msra.mxu0 0
    %939 = vmatprep.subr.bf16.mxu0 0
    %940 = vmatpush1.bf16.msra.mxu0 0
    %941 = vmatprep.subr.bf16.mxu0 0
    %942 = vmatpush1.bf16.msra.mxu0 0
    %943 = vmatprep.subr.bf16.mxu0 0
    %944 = vmatpush1.bf16.msra.mxu0 0
    %945 = vmatprep.subr.bf16.mxu0 0
    %946 = vmatpush1.bf16.msra.mxu0 0
    %947 = vmatprep.subr.bf16.mxu0 0
    %948 = vmatpush1.bf16.msra.mxu0 0
    %949 = vmatprep.subr.bf16.mxu0 0
    %950 = vmatpush1.bf16.msra.mxu0 0
    %951 = vmatprep.subr.bf16.mxu0 0
    %952 = vmatpush1.bf16.msra.mxu0 0
    %953 = vmatprep.subr.bf16.mxu0 0
    %954 = vmatpush1.bf16.msra.mxu0 0
    %955 = vmatprep.subr.bf16.mxu0 0
    %956 = vmatpush1.bf16.msra.mxu0 0
    %957 = vmatprep.subr.bf16.mxu0 0
    %958 = vmatpush1.bf16.msra.mxu0 0
    %959 = vmatprep.subr.bf16.mxu0 0
    %960 = vmatpush1.bf16.msra.mxu0 0
    %961 = vmatprep.subr.bf16.mxu0 0
    %962 = vmatpush1.bf16.msra.mxu0 0
    %963 = vmatprep.subr.bf16.mxu0 0
    %964 = vmatpush1.bf16.msra.mxu0 0
    %965 = vmatprep.mubr.bf16.mxu0 0
    %966 = vmatmul.mubr.bf16.gmra.mrb[0].mxu0 %v931
    %v967 = vpop.f32.mrb[0].mxu0
    %v968 = vadd.f32 %v917, %v967
    %v969 = vpop.f32.mrb[0].mxu0
    %v970 = vpop.f32.mrb[0].mxu0
    %v971 = vadd.f32 %v917, %v970
    %v972 = vpop.f32.mrb[0].mxu0
    %973 = vdwg.mxu0
    %v974 = vmul.f32 %v968, 0.5
    %v975 = vmul.f32 %v971, 0.5
    %v976 = vmul.f32 %v968, 0.044715
    %v977 = vmul.f32 %v971, 0.044715
    %v978 = vmul.f32 %v976, %v968
    %v979 = vmul.f32 %v977, %v971
    %v980 = vmul.f32 %v978, %v968
    %v981 = vmul.f32 %v979, %v971
    %v982 = vadd.f32 %v968, %v980
    %v983 = vadd.f32 %v971, %v981
    %v984 = vmul.f32 %v982, 0.7978846
    %v985 = vmul.f32 %v983, 0.7978846
    %v986 = vtanh.pop %v984
    %v987 = vtanh.pop %v985
    %v988 = vadd.f32 %v986, 1.0
    %v989 = vadd.f32 %v987, 1.0
    %v990 = vmul.f32 %v974, %v988
    %v991 = vmul.f32 %v975, %v989
    %v992 = vpack.c.bf16 %v991, %v990
    %v993 = vlaneseq
    %v994 = vshrl.u32 %v993, 7
    %v995 = vsub.s32 0, %v994
    %v996 = vrot.slane %v301, %v995
    %v1005 = vunpack.c.l.b16 %v286
    %v1006 = vunpack.c.l.b16 %v287
    %v1007 = vunpack.c.l.b16 %v288
    %v1008 = vunpack.c.l.b16 %v289
    %v1009 = vunpack.c.l.b16 %v290
    %v1010 = vunpack.c.l.b16 %v291
    %v1011 = vunpack.c.l.b16 %v292
    %v1012 = vunpack.c.l.b16 %v293
    %v1013 = vpack.c.b16 %v1006, %v1005
    %v1014 = vpack.c.b16 %v1008, %v1007
    %v1015 = vpack.c.b16 %v1010, %v1009
    %v1016 = vpack.c.b16 %v1012, %v1011
    %v1022 = vsel %vm148, %v992, 0
    %1024 = vmatprep.subr.bf16.mxu0 0
    %1025 = vmatpush1.bf16.msra.mxu0 %v1013
    %1026 = vmatprep.subr.bf16.mxu0 0
    %1027 = vmatpush1.bf16.msra.mxu0 %v1014
    %1028 = vmatprep.subr.bf16.mxu0 0
    %1029 = vmatpush1.bf16.msra.mxu0 %v1015
    %1030 = vmatprep.subr.bf16.mxu0 0
    %1031 = vmatpush1.bf16.msra.mxu0 %v1016
    %1032 = vmatprep.subr.bf16.mxu0 0
    %1033 = vmatpush1.bf16.msra.mxu0 0
    %1034 = vmatprep.subr.bf16.mxu0 0
    %1035 = vmatpush1.bf16.msra.mxu0 0
    %1036 = vmatprep.subr.bf16.mxu0 0
    %1037 = vmatpush1.bf16.msra.mxu0 0
    %1038 = vmatprep.subr.bf16.mxu0 0
    %1039 = vmatpush1.bf16.msra.mxu0 0
    %1040 = vmatprep.subr.bf16.mxu0 0
    %1041 = vmatpush1.bf16.msra.mxu0 0
    %1042 = vmatprep.subr.bf16.mxu0 0
    %1043 = vmatpush1.bf16.msra.mxu0 0
    %1044 = vmatprep.subr.bf16.mxu0 0
    %1045 = vmatpush1.bf16.msra.mxu0 0
    %1046 = vmatprep.subr.bf16.mxu0 0
    %1047 = vmatpush1.bf16.msra.mxu0 0
    %1048 = vmatprep.subr.bf16.mxu0 0
    %1049 = vmatpush1.bf16.msra.mxu0 0
    %1050 = vmatprep.subr.bf16.mxu0 0
    %1051 = vmatpush1.bf16.msra.mxu0 0
    %1052 = vmatprep.subr.bf16.mxu0 0
    %1053 = vmatpush1.bf16.msra.mxu0 0
    %1054 = vmatprep.subr.bf16.mxu0 0
    %1055 = vmatpush1.bf16.msra.mxu0 0
    %1056 = vmatprep.mubr.bf16.mxu0 0
    %1057 = vmatmul.mubr.bf16.gmra.mrb[0].mxu0 %v1022
    %v1058 = vpop.f32.mrb[0].mxu0
    %v1059 = vadd.f32 %v996, %v1058
    %v1060 = vpop.f32.mrb[0].mxu0
    %v1061 = vpop.f32.mrb[0].mxu0
    %v1062 = vadd.f32 %v996, %v1061
    %v1063 = vpop.f32.mrb[0].mxu0
    %1064 = vdwg.mxu0
    %v1065 = vadd.f32 %v873, %v1059
    %v1066 = vadd.f32 %v874, %v1062
    %v1067 = vld [vmem:[%s1 + $0xc0] sm:$0xf]
    %v1068 = vld [vmem:[%s1 + $0xc4] sm:$0xf]
    %v1069 = vld [vmem:[%s1 + $0xc8] sm:$0xf]
    %v1070 = vld [vmem:[%s1 + $0xcc] sm:$0xf]
    %v1071 = vld [vmem:[%s1 + $0xd0] sm:$0xf]
    %v1072 = vld [vmem:[%s1 + $0xd4] sm:$0xf]
    %v1073 = vld [vmem:[%s1 + $0xd8] sm:$0xf]
    %v1074 = vld [vmem:[%s1 + $0xdc] sm:$0xf]
    %v1075 = vld [vmem:[%s1 + $0xe0] sm:$0xf]
    %v1076 = vld [vmem:[%s1 + $0xe4] sm:$0xf]
    %v1077 = vld [vmem:[%s1 + $0xe8] sm:$0xf]
    %v1078 = vld [vmem:[%s1 + $0xec] sm:$0xf]
    %v1079 = vld [vmem:[%s1 + $0xf0] sm:$0xf]
    %v1080 = vld [vmem:[%s1 + $0xf4] sm:$0xf]
    %v1081 = vld [vmem:[%s1 + $0xf8] sm:$0xf]
    %v1082 = vld [vmem:[%s1 + $0xfc] sm:$0xf]
    %v1083 = vld [vmem:[%s1 + $0x100] sm:$0xf]
    %v1084 = vld [vmem:[%s1 + $0x104] sm:$0xf]
    %v1085 = vld [vmem:[%s1 + $0x108] sm:$0xf]
    %v1086 = vld [vmem:[%s1 + $0x10c] sm:$0xf]
    %v1087 = vld [vmem:[%s2 + $0xc0] sm:$0x1]
    %v1088 = vld [vmem:[%s2 + $0xc1] sm:$0x1]
    %v1089 = vld [vmem:[%s2 + $0xc2] sm:$0x1]
    %v1090 = vld [vmem:[%s2 + $0xc3] sm:$0x1]
    %v1091 = vld [vmem:[%s2 + $0xc4] sm:$0x1]
    %v1092 = vld [vmem:[%s2 + $0xc5] sm:$0x1]
    %v1093 = vld [vmem:[%s2 + $0xc6] sm:$0x1]
    %v1094 = vld [vmem:[%s2 + $0xc7] sm:$0x1]
    %v1095 = vsel %vm302, %v1065, 0.0
    %1096 = vadd.xlane.f32.xlu0 %v1095
    %v1097 = vpop.xlane.xlu0 %1096
    %v1098 = vsel %vm306, %v1066, 0.0
    %1099 = vadd.xlane.f32.xlu0 %v1098
    %v1100 = vpop.xlane.xlu0 %1099
    %v1101 = vmul.f32 %v1097, %v310
    %v1102 = vmul.f32 %v1100, %v310
    %v1103 = vsub.f32 %v1065, %v1101
    %v1104 = vsub.f32 %v1066, %v1102
    %v1105 = vmul.f32 %v1103, %v1103
    %v1106 = vmul.f32 %v1104, %v1104
    %v1107 = vsel %vm302, %v1105, 0.0
    %1108 = vadd.xlane.f32.xlu0 %v1107
    %v1109 = vpop.xlane.xlu0 %1108
    %v1110 = vsel %vm306, %v1106, 0.0
    %1111 = vadd.xlane.f32.xlu0 %v1110
    %v1112 = vpop.xlane.xlu0 %1111
    %v1113 = vmul.f32 %v1109, %v310
    %v1114 = vmul.f32 %v1112, %v310
    %v1115 = vadd.f32 %v1113, 1e-12
    %v1116 = vadd.f32 %v1114, 1e-12
    %v1117 = vrsqrt.pop %v1115
    %v1118 = vrsqrt.pop %v1116
    %v1119 = vmul.f32 %v1103, %v1117
    %v1120 = vmul.f32 %v1104, %v1118
    %v1121 = vlaneseq
    %v1122 = vshrl.u32 %v1121, 7
    %v1123 = vsub.s32 0, %v1122
    %v1124 = vrot.slane %v1087, %v1123
    %v1125 = vmul.f32 %v1119, %v1124
    %v1126 = vmul.f32 %v1120, %v1124
    %v1127 = vlaneseq
    %v1128 = vshrl.u32 %v1127, 7
    %v1129 = vsub.s32 0, %v1128
    %v1130 = vrot.slane %v1088, %v1129
    %v1131 = vadd.f32 %v1125, %v1130
    %v1132 = vadd.f32 %v1126, %v1130
    %v1133 = vpack.c.bf16 %v1132, %v1131
    %v1134 = vlaneseq
    %v1135 = vshrl.u32 %v1134, 7
    %v1136 = vsub.s32 0, %v1135
    %v1137 = vrot.slane %v1091, %v1136
    %v1142 = vunpack.c.l.b16 %v1067
    %v1143 = vunpack.c.l.b16 %v1068
    %v1144 = vunpack.c.l.b16 %v1069
    %v1145 = vunpack.c.l.b16 %v1070
    %v1146 = vpack.c.b16 %v1143, %v1142
    %v1147 = vpack.c.b16 %v1145, %v1144
    %v1151 = vsel %vm302, %v1133, 0
    %1153 = vmatprep.subr.bf16.mxu0 0
    %1154 = vmatpush1.bf16.msra.mxu0 %v1146
    %1155 = vmatprep.subr.bf16.mxu0 0
    %1156 = vmatpush1.bf16.msra.mxu0 %v1147
    %1157 = vmatprep.subr.bf16.mxu0 0
    %1158 = vmatpush1.bf16.msra.mxu0 0
    %1159 = vmatprep.subr.bf16.mxu0 0
    %1160 = vmatpush1.bf16.msra.mxu0 0
    %1161 = vmatprep.subr.bf16.mxu0 0
    %1162 = vmatpush1.bf16.msra.mxu0 0
    %1163 = vmatprep.subr.bf16.mxu0 0
    %1164 = vmatpush1.bf16.msra.mxu0 0
    %1165 = vmatprep.subr.bf16.mxu0 0
    %1166 = vmatpush1.bf16.msra.mxu0 0
    %1167 = vmatprep.subr.bf16.mxu0 0
    %1168 = vmatpush1.bf16.msra.mxu0 0
    %1169 = vmatprep.subr.bf16.mxu0 0
    %1170 = vmatpush1.bf16.msra.mxu0 0
    %1171 = vmatprep.subr.bf16.mxu0 0
    %1172 = vmatpush1.bf16.msra.mxu0 0
    %1173 = vmatprep.subr.bf16.mxu0 0
    %1174 = vmatpush1.bf16.msra.mxu0 0
    %1175 = vmatprep.subr.bf16.mxu0 0
    %1176 = vmatpush1.bf16.msra.mxu0 0
    %1177 = vmatprep.subr.bf16.mxu0 0
    %1178 = vmatpush1.bf16.msra.mxu0 0
    %1179 = vmatprep.subr.bf16.mxu0 0
    %1180 = vmatpush1.bf16.msra.mxu0 0
    %1181 = vmatprep.subr.bf16.mxu0 0
    %1182 = vmatpush1.bf16.msra.mxu0 0
    %1183 = vmatprep.subr.bf16.mxu0 0
    %1184 = vmatpush1.bf16.msra.mxu0 0
    %1185 = vmatprep.mubr.bf16.mxu0 0
    %1186 = vmatmul.mubr.bf16.gmra.mrb[0].mxu0 %v1151
    %v1187 = vpop.f32.mrb[0].mxu0
    %v1188 = vadd.f32 %v1137, %v1187
    %v1189 = vpop.f32.mrb[0].mxu0
    %v1190 = vpop.f32.mrb[0].mxu0
    %v1191 = vadd.f32 %v1137, %v1190
    %v1192 = vpop.f32.mrb[0].mxu0
    %1193 = vdwg.mxu0
    %v1194 = vmul.f32 %v1188, 0.35355338
    %v1195 = vmul.f32 %v1191, 0.35355338
    %v1197 = vsel %vm422, %v1195, 0
    %1199 = vmatprep.subr.mxu0 0.0
    %1200 = vmatpush1.msra.mxu0 %v1194
    %1201 = vmatprep.subr.mxu0 0.0
    %1202 = vmatpush1.msra.mxu0 %v1197
    %1203 = vmatprep.subr.mxu0 0.0
    %1204 = vmatpush1.msra.mxu0 0.0
    %1205 = vmatprep.subr.mxu0 0.0
    %1206 = vmatpush1.msra.mxu0 0.0
    %1207 = vmatprep.subr.mxu0 0.0
    %1208 = vmatpush1.msra.mxu0 0.0
    %1209 = vmatprep.subr.mxu0 0.0
    %1210 = vmatpush1.msra.mxu0 0.0
    %1211 = vmatprep.subr.mxu0 0.0
    %1212 = vmatpush1.msra.mxu0 0.0
    %1213 = vmatprep.subr.mxu0 0.0
    %1214 = vmatpush1.msra.mxu0 0.0
    %1215 = vmatprep.subr.mxu0 0.0
    %1216 = vmatpush1.msra.mxu0 0.0
    %1217 = vmatprep.subr.mxu0 0.0
    %1218 = vmatpush1.msra.mxu0 0.0
    %1219 = vmatprep.subr.mxu0 0.0
    %1220 = vmatpush1.msra.mxu0 0.0
    %1221 = vmatprep.subr.mxu0 0.0
    %1222 = vmatpush1.msra.mxu0 0.0
    %1223 = vmatprep.subr.mxu0 0.0
    %1224 = vmatpush1.msra.mxu0 0.0
    %1225 = vmatprep.subr.mxu0 0.0
    %1226 = vmatpush1.msra.mxu0 0.0
    %1227 = vmatprep.subr.mxu0 0.0
    %1228 = vmatpush1.msra.mxu0 0.0
    %1229 = vmatprep.subr.mxu0 0.0
    %1230 = vmatpush1.msra.mxu0 0.0
    %1231 = vmatprep.subr.mxu0 0.0
    %1232 = vmatpush1.msra.mxu0 0.0
    %1233 = vmatprep.subr.mxu0 0.0
    %1234 = vmatpush1.msra.mxu0 0.0
    %1235 = vmatprep.subr.mxu0 0.0
    %1236 = vmatpush1.msra.mxu0 0.0
    %1237 = vmatprep.subr.mxu0 0.0
    %1238 = vmatpush1.msra.mxu0 0.0
    %1239 = vmatprep.subr.mxu0 0.0
    %1240 = vmatpush1.msra.mxu0 0.0
    %1241 = vmatprep.subr.mxu0 0.0
    %1242 = vmatpush1.msra.mxu0 0.0
    %1243 = vmatprep.subr.mxu0 0.0
    %1244 = vmatpush1.msra.mxu0 0.0
    %1245 = vmatprep.subr.mxu0 0.0
    %1246 = vmatpush1.msra.mxu0 0.0
    %1247 = vmatprep.subr.mxu0 0.0
    %1248 = vmatpush1.msra.mxu0 0.0
    %1249 = vmatprep.subr.mxu0 0.0
    %1250 = vmatpush1.msra.mxu0 0.0
    %1251 = vmatprep.subr.mxu0 0.0
    %1252 = vmatpush1.msra.mxu0 0.0
    %1253 = vmatprep.subr.mxu0 0.0
    %1254 = vmatpush1.msra.mxu0 0.0
    %1255 = vmatprep.subr.mxu0 0.0
    %1256 = vmatpush1.msra.mxu0 0.0
    %1257 = vmatprep.subr.mxu0 0.0
    %1258 = vmatpush1.msra.mxu0 0.0
    %1259 = vmatprep.subr.mxu0 0.0
    %1260 = vmatpush1.msra.mxu0 0.0
    %1261 = vmatprep.subr.mxu0 0.0
    %1262 = vmatpush1.msra.mxu0 0.0
    %1263 = vmatprep.mubr.f32.mxu0 0.0
    %1264 = vmatmul.mubr.f32.gmra.mrb[0].mxu0 %v408
    %v1265 = vpop.f32.mrb[0].mxu0
    %v1266 = vadd.f32 0.0, %v1265
    %v1267 = vpop.f32.mrb[0].mxu0
    %1268 = vmatprep.mubr.f32.mxu0 0.0
    %1269 = vmatmul.mubr.f32.gmra.mrb[0].mxu0 %v411
    %v1270 = vpop.f32.mrb[0].mxu0
    %v1271 = vadd.f32 0.0, %v1270
    %v1272 = vpop.f32.mrb[0].mxu0
    %1273 = vmatprep.mubr.f32.mxu0 0.0
    %1274 = vmatmul.mubr.f32.gmra.mrb[0].mxu0 %v414
    %v1275 = vpop.f32.mrb[0].mxu0
    %v1276 = vadd.f32 0.0, %v1275
    %v1277 = vpop.f32.mrb[0].mxu0
    %1278 = vmatprep.mubr.f32.mxu0 0.0
    %1279 = vmatmul.mubr.f32.gmra.mrb[0].mxu0 %v417
    %v1280 = vpop.f32.mrb[0].mxu0
    %v1281 = vadd.f32 0.0, %v1280
    %v1282 = vpop.f32.mrb[0].mxu0
    %1283 = vmatprep.mubr.f32.mxu0 0.0
    %1284 = vmatmul.mubr.f32.gmra.mrb[0].mxu0 %v420
    %v1285 = vpop.f32.mrb[0].mxu0
    %v1286 = vadd.f32 0.0, %v1285
    %v1287 = vpop.f32.mrb[0].mxu0
    %1288 = vdwg.mxu0
    %v1289 = vmul.f32 %v1266, %v47
    %v1290 = vmul.f32 %v1271, %v48
    %v1291 = vmul.f32 %v1276, %v49
    %v1292 = vmul.f32 %v1281, %v50
    %v1293 = vmul.f32 %v1286, %v51
    %v1294 = vpack.c.bf16 %v1290, %v1289
    %v1295 = vpack.c.bf16 %v1292, %v1291
    %v1296 = vpack.c.bf16 %v1293, %v1293
    %v1297 = vpack.c.bf16 %v1191, %v1188
    %1299 = vrot.lane.b32.xlu0 %v1297, 96
    %v1300 = vpop.permute.xlu0 %1299
    %v1302 = vsel %vm302, %v1294, 0
    %v1305 = vsel %vm302, %v1295, 0
    %v1308 = vsel %vm302, %v1296, 0
    %v1311 = vsel %vm302, %v1300, 0
    %1313 = vmatprep.subr.bf16.mxu0 0
    %1314 = vmatpush1.bf16.xpose.msra.mxu0 %v1311
    %1315 = vmatprep.subr.bf16.mxu0 0
    %1316 = vmatpush1.bf16.xpose.msra.mxu0 0
    %1317 = vmatprep.subr.bf16.mxu0 0
    %1318 = vmatpush1.bf16.xpose.msra.mxu0 0
    %1319 = vmatprep.subr.bf16.mxu0 0
    %1320 = vmatpush1.bf16.xpose.msra.mxu0 0
    %1321 = vmatprep.subr.bf16.mxu0 0
    %1322 = vmatpush1.bf16.xpose.msra.mxu0 0
    %1323 = vmatprep.subr.bf16.mxu0 0
    %1324 = vmatpush1.bf16.xpose.msra.mxu0 0
    %1325 = vmatprep.subr.bf16.mxu0 0
    %1326 = vmatpush1.bf16.xpose.msra.mxu0 0
    %1327 = vmatprep.subr.bf16.mxu0 0
    %1328 = vmatpush1.bf16.xpose.msra.mxu0 0
    %1329 = vmatprep.subr.bf16.mxu0 0
    %1330 = vmatpush1.bf16.xpose.msra.mxu0 0
    %1331 = vmatprep.subr.bf16.mxu0 0
    %1332 = vmatpush1.bf16.xpose.msra.mxu0 0
    %1333 = vmatprep.subr.bf16.mxu0 0
    %1334 = vmatpush1.bf16.xpose.msra.mxu0 0
    %1335 = vmatprep.subr.bf16.mxu0 0
    %1336 = vmatpush1.bf16.xpose.msra.mxu0 0
    %1337 = vmatprep.subr.bf16.mxu0 0
    %1338 = vmatpush1.bf16.xpose.msra.mxu0 0
    %1339 = vmatprep.subr.bf16.mxu0 0
    %1340 = vmatpush1.bf16.xpose.msra.mxu0 0
    %1341 = vmatprep.subr.bf16.mxu0 0
    %1342 = vmatpush1.bf16.xpose.msra.mxu0 0
    %1343 = vmatprep.subr.bf16.mxu0 0
    %1344 = vmatpush1.bf16.xpose.msra.mxu0 0
    %1345 = vmatprep.mubr.bf16.mxu0 0
    %1346 = vmatmul.mubr.bf16.gmra.mrb[0].mxu0 %v1302
    %v1347 = vpop.f32.mrb[0].mxu0
    %v1348 = vadd.f32 %v52, %v1347
    %v1349 = vpop.f32.mrb[0].mxu0
    %v1350 = vpop.f32.mrb[0].mxu0
    %v1351 = vadd.f32 %v53, %v1350
    %v1352 = vpop.f32.mrb[0].mxu0
    %1353 = vmatprep.mubr.bf16.mxu0 0
    %1354 = vmatmul.mubr.bf16.gmra.mrb[0].mxu0 %v1305
    %v1355 = vpop.f32.mrb[0].mxu0
    %v1356 = vadd.f32 %v54, %v1355
    %v1357 = vpop.f32.mrb[0].mxu0
    %v1358 = vpop.f32.mrb[0].mxu0
    %v1359 = vadd.f32 %v55, %v1358
    %v1360 = vpop.f32.mrb[0].mxu0
    %1361 = vmatprep.mubr.bf16.mxu0 0
    %1362 = vmatmul.mubr.bf16.gmra.mrb[0].mxu0 %v1308
    %v1363 = vpop.f32.mrb[0].mxu0
    %v1364 = vadd.f32 %v56, %v1363
    %v1365 = vpop.f32.mrb[0].mxu0
    %v1366 = vpop.f32.mrb[0].mxu0
    %v1367 = vpop.f32.mrb[0].mxu0
    %1368 = vdwg.mxu0
    %v1369 = vsel %vm406, %v1348, -inf
    %1370 = vmax.xlane.f32.xlu0 %v1369
    %v1371 = vpop.xlane.xlu0 %1370
    %v1372 = vsel %vm406, %v1351, -inf
    %1373 = vmax.xlane.f32.xlu0 %v1372
    %v1374 = vpop.xlane.xlu0 %1373
    %v1375 = vsel %vm406, %v1356, -inf
    %1376 = vmax.xlane.f32.xlu0 %v1375
    %v1377 = vpop.xlane.xlu0 %1376
    %v1378 = vsel %vm406, %v1359, -inf
    %1379 = vmax.xlane.f32.xlu0 %v1378
    %v1380 = vpop.xlane.xlu0 %1379
    %v1381 = vsel %vm406, %v1364, -inf
    %1382 = vmax.xlane.f32.xlu0 %v1381
    %v1383 = vpop.xlane.xlu0 %1382
    %v1384 = vsub.f32 %v1348, %v1371
    %v1385 = vsub.f32 %v1351, %v1374
    %v1386 = vsub.f32 %v1356, %v1377
    %v1387 = vsub.f32 %v1359, %v1380
    %v1388 = vsub.f32 %v1364, %v1383
    %v1389 = vmul.f32 %v1384, 1.442695
    %v1390 = vpow.pop %v1389
    %v1391 = vmul.f32 %v1385, 1.442695
    %v1392 = vpow.pop %v1391
    %v1393 = vmul.f32 %v1386, 1.442695
    %v1394 = vpow.pop %v1393
    %v1395 = vmul.f32 %v1387, 1.442695
    %v1396 = vpow.pop %v1395
    %v1397 = vmul.f32 %v1388, 1.442695
    %v1398 = vpow.pop %v1397
    %v1399 = vsel %vm406, %v1390, 0.0
    %1400 = vadd.xlane.f32.xlu0 %v1399
    %v1401 = vpop.xlane.xlu0 %1400
    %v1402 = vsel %vm406, %v1392, 0.0
    %1403 = vadd.xlane.f32.xlu0 %v1402
    %v1404 = vpop.xlane.xlu0 %1403
    %v1405 = vsel %vm406, %v1394, 0.0
    %1406 = vadd.xlane.f32.xlu0 %v1405
    %v1407 = vpop.xlane.xlu0 %1406
    %v1408 = vsel %vm406, %v1396, 0.0
    %1409 = vadd.xlane.f32.xlu0 %v1408
    %v1410 = vpop.xlane.xlu0 %1409
    %v1411 = vsel %vm406, %v1398, 0.0
    %1412 = vadd.xlane.f32.xlu0 %v1411
    %v1413 = vpop.xlane.xlu0 %1412
    %v1414 = vrcp.pop %v1401
    %v1415 = vrcp.pop %v1404
    %v1416 = vrcp.pop %v1407
    %v1417 = vrcp.pop %v1410
    %v1418 = vrcp.pop %v1413
    %v1419 = vmul.f32 %v1390, %v1414
    %v1420 = vmul.f32 %v1392, %v1415
    %v1421 = vmul.f32 %v1394, %v1416
    %v1422 = vmul.f32 %v1396, %v1417
    %v1423 = vmul.f32 %v1398, %v1418
    %v1424 = vpack.c.bf16 %v1420, %v1419
    %v1425 = vpack.c.bf16 %v1422, %v1421
    %v1426 = vpack.c.bf16 %v1423, %v1423
    %1427 = vrot.lane.b32.xlu0 %v1297, 64
    %v1428 = vpop.permute.xlu0 %1427
    %v1430 = vsel %vm406, %v1424, 0
    %v1433 = vsel %vm406, %v1425, 0
    %v1436 = vsel %vm406, %v1426, 0
    %v1439 = vsel %vm665, %v1428, 0
    %1441 = vmatprep.subr.bf16.mxu0 0
    %1442 = vmatpush1.bf16.msra.mxu0 %v1439
    %1443 = vmatprep.subr.bf16.mxu0 0
    %1444 = vmatpush1.bf16.msra.mxu0 0
    %1445 = vmatprep.subr.bf16.mxu0 0
    %1446 = vmatpush1.bf16.msra.mxu0 0
    %1447 = vmatprep.subr.bf16.mxu0 0
    %1448 = vmatpush1.bf16.msra.mxu0 0
    %1449 = vmatprep.subr.bf16.mxu0 0
    %1450 = vmatpush1.bf16.msra.mxu0 0
    %1451 = vmatprep.subr.bf16.mxu0 0
    %1452 = vmatpush1.bf16.msra.mxu0 0
    %1453 = vmatprep.subr.bf16.mxu0 0
    %1454 = vmatpush1.bf16.msra.mxu0 0
    %1455 = vmatprep.subr.bf16.mxu0 0
    %1456 = vmatpush1.bf16.msra.mxu0 0
    %1457 = vmatprep.subr.bf16.mxu0 0
    %1458 = vmatpush1.bf16.msra.mxu0 0
    %1459 = vmatprep.subr.bf16.mxu0 0
    %1460 = vmatpush1.bf16.msra.mxu0 0
    %1461 = vmatprep.subr.bf16.mxu0 0
    %1462 = vmatpush1.bf16.msra.mxu0 0
    %1463 = vmatprep.subr.bf16.mxu0 0
    %1464 = vmatpush1.bf16.msra.mxu0 0
    %1465 = vmatprep.subr.bf16.mxu0 0
    %1466 = vmatpush1.bf16.msra.mxu0 0
    %1467 = vmatprep.subr.bf16.mxu0 0
    %1468 = vmatpush1.bf16.msra.mxu0 0
    %1469 = vmatprep.subr.bf16.mxu0 0
    %1470 = vmatpush1.bf16.msra.mxu0 0
    %1471 = vmatprep.subr.bf16.mxu0 0
    %1472 = vmatpush1.bf16.msra.mxu0 0
    %1473 = vmatprep.mubr.bf16.mxu0 0
    %1474 = vmatmul.mubr.bf16.gmra.mrb[0].mxu0 %v1430
    %v1475 = vpop.f32.mrb[0].mxu0
    %v1476 = vadd.f32 0.0, %v1475
    %v1477 = vpop.f32.mrb[0].mxu0
    %v1478 = vpop.f32.mrb[0].mxu0
    %v1479 = vadd.f32 0.0, %v1478
    %v1480 = vpop.f32.mrb[0].mxu0
    %1481 = vmatprep.mubr.bf16.mxu0 0
    %1482 = vmatmul.mubr.bf16.gmra.mrb[0].mxu0 %v1433
    %v1483 = vpop.f32.mrb[0].mxu0
    %v1484 = vadd.f32 0.0, %v1483
    %v1485 = vpop.f32.mrb[0].mxu0
    %v1486 = vpop.f32.mrb[0].mxu0
    %v1487 = vadd.f32 0.0, %v1486
    %v1488 = vpop.f32.mrb[0].mxu0
    %1489 = vmatprep.mubr.bf16.mxu0 0
    %1490 = vmatmul.mubr.bf16.gmra.mrb[0].mxu0 %v1436
    %v1491 = vpop.f32.mrb[0].mxu0
    %v1492 = vadd.f32 0.0, %v1491
    %v1493 = vpop.f32.mrb[0].mxu0
    %v1494 = vpop.f32.mrb[0].mxu0
    %v1495 = vpop.f32.mrb[0].mxu0
    %1496 = vdwg.mxu0
    %v1497 = vmul.f32 %v1476, %v47
    %v1498 = vmul.f32 %v1479, %v48
    %v1499 = vmul.f32 %v1484, %v49
    %v1500 = vmul.f32 %v1487, %v50
    %v1501 = vmul.f32 %v1492, %v51
    %1502 = vmatprep.subr.mxu0 0.0
    %1503 = vmatpush1.msra.mxu0 %v1497
    %1504 = vmatprep.subr.mxu0 0.0
    %1505 = vmatpush1.msra.mxu0 %v1498
    %1506 = vmatprep.subr.mxu0 0.0
    %1507 = vmatpush1.msra.mxu0 %v1499
    %1508 = vmatprep.subr.mxu0 0.0
    %1509 = vmatpush1.msra.mxu0 %v1500
    %1510 = vmatprep.subr.mxu0 0.0
    %1511 = vmatpush1.msra.mxu0 %v1501
    %1512 = vmatprep.subr.mxu0 0.0
    %1513 = vmatpush1.msra.mxu0 0.0
    %1514 = vmatprep.subr.mxu0 0.0
    %1515 = vmatpush1.msra.mxu0 0.0
    %1516 = vmatprep.subr.mxu0 0.0
    %1517 = vmatpush1.msra.mxu0 0.0
    %1518 = vmatprep.subr.mxu0 0.0
    %1519 = vmatpush1.msra.mxu0 0.0
    %1520 = vmatprep.subr.mxu0 0.0
    %1521 = vmatpush1.msra.mxu0 0.0
    %1522 = vmatprep.subr.mxu0 0.0
    %1523 = vmatpush1.msra.mxu0 0.0
    %1524 = vmatprep.subr.mxu0 0.0
    %1525 = vmatpush1.msra.mxu0 0.0
    %1526 = vmatprep.subr.mxu0 0.0
    %1527 = vmatpush1.msra.mxu0 0.0
    %1528 = vmatprep.subr.mxu0 0.0
    %1529 = vmatpush1.msra.mxu0 0.0
    %1530 = vmatprep.subr.mxu0 0.0
    %1531 = vmatpush1.msra.mxu0 0.0
    %1532 = vmatprep.subr.mxu0 0.0
    %1533 = vmatpush1.msra.mxu0 0.0
    %1534 = vmatprep.subr.mxu0 0.0
    %1535 = vmatpush1.msra.mxu0 0.0
    %1536 = vmatprep.subr.mxu0 0.0
    %1537 = vmatpush1.msra.mxu0 0.0
    %1538 = vmatprep.subr.mxu0 0.0
    %1539 = vmatpush1.msra.mxu0 0.0
    %1540 = vmatprep.subr.mxu0 0.0
    %1541 = vmatpush1.msra.mxu0 0.0
    %1542 = vmatprep.subr.mxu0 0.0
    %1543 = vmatpush1.msra.mxu0 0.0
    %1544 = vmatprep.subr.mxu0 0.0
    %1545 = vmatpush1.msra.mxu0 0.0
    %1546 = vmatprep.subr.mxu0 0.0
    %1547 = vmatpush1.msra.mxu0 0.0
    %1548 = vmatprep.subr.mxu0 0.0
    %1549 = vmatpush1.msra.mxu0 0.0
    %1550 = vmatprep.subr.mxu0 0.0
    %1551 = vmatpush1.msra.mxu0 0.0
    %1552 = vmatprep.subr.mxu0 0.0
    %1553 = vmatpush1.msra.mxu0 0.0
    %1554 = vmatprep.subr.mxu0 0.0
    %1555 = vmatpush1.msra.mxu0 0.0
    %1556 = vmatprep.subr.mxu0 0.0
    %1557 = vmatpush1.msra.mxu0 0.0
    %1558 = vmatprep.subr.mxu0 0.0
    %1559 = vmatpush1.msra.mxu0 0.0
    %1560 = vmatprep.subr.mxu0 0.0
    %1561 = vmatpush1.msra.mxu0 0.0
    %1562 = vmatprep.subr.mxu0 0.0
    %1563 = vmatpush1.msra.mxu0 0.0
    %1564 = vmatprep.subr.mxu0 0.0
    %1565 = vmatpush1.msra.mxu0 0.0
    %1566 = vmatprep.mubr.f32.mxu0 0.0
    %1567 = vmatmul.mubr.f32.gmra.mrb[0].mxu0 %v732
    %v1568 = vpop.f32.mrb[0].mxu0
    %v1569 = vadd.f32 0.0, %v1568
    %v1570 = vpop.f32.mrb[0].mxu0
    %1571 = vmatprep.mubr.f32.mxu0 0.0
    %1572 = vmatmul.mubr.f32.gmra.mrb[0].mxu0 %v735
    %v1573 = vpop.f32.mrb[0].mxu0
    %v1574 = vadd.f32 0.0, %v1573
    %v1575 = vpop.f32.mrb[0].mxu0
    %1576 = vdwg.mxu0
    %v1577 = vpack.c.bf16 %v1574, %v1569
    %v1578 = vlaneseq
    %v1579 = vshrl.u32 %v1578, 7
    %v1580 = vsub.s32 0, %v1579
    %v1581 = vrot.slane %v1092, %v1580
    %v1586 = vunpack.c.l.b16 %v1071
    %v1587 = vunpack.c.l.b16 %v1072
    %v1588 = vunpack.c.l.b16 %v1073
    %v1589 = vunpack.c.l.b16 %v1074
    %v1590 = vpack.c.b16 %v1587, %v1586
    %v1591 = vpack.c.b16 %v1589, %v1588
    %v1595 = vsel %vm302, %v1577, 0
    %1597 = vmatprep.subr.bf16.mxu0 0
    %1598 = vmatpush1.bf16.msra.mxu0 %v1590
    %1599 = vmatprep.subr.bf16.mxu0 0
    %1600 = vmatpush1.bf16.msra.mxu0 %v1591
    %1601 = vmatprep.subr.bf16.mxu0 0
    %1602 = vmatpush1.bf16.msra.mxu0 0
    %1603 = vmatprep.subr.bf16.mxu0 0
    %1604 = vmatpush1.bf16.msra.mxu0 0
    %1605 = vmatprep.subr.bf16.mxu0 0
    %1606 = vmatpush1.bf16.msra.mxu0 0
    %1607 = vmatprep.subr.bf16.mxu0 0
    %1608 = vmatpush1.bf16.msra.mxu0 0
    %1609 = vmatprep.subr.bf16.mxu0 0
    %1610 = vmatpush1.bf16.msra.mxu0 0
    %1611 = vmatprep.subr.bf16.mxu0 0
    %1612 = vmatpush1.bf16.msra.mxu0 0
    %1613 = vmatprep.subr.bf16.mxu0 0
    %1614 = vmatpush1.bf16.msra.mxu0 0
    %1615 = vmatprep.subr.bf16.mxu0 0
    %1616 = vmatpush1.bf16.msra.mxu0 0
    %1617 = vmatprep.subr.bf16.mxu0 0
    %1618 = vmatpush1.bf16.msra.mxu0 0
    %1619 = vmatprep.subr.bf16.mxu0 0
    %1620 = vmatpush1.bf16.msra.mxu0 0
    %1621 = vmatprep.subr.bf16.mxu0 0
    %1622 = vmatpush1.bf16.msra.mxu0 0
    %1623 = vmatprep.subr.bf16.mxu0 0
    %1624 = vmatpush1.bf16.msra.mxu0 0
    %1625 = vmatprep.subr.bf16.mxu0 0
    %1626 = vmatpush1.bf16.msra.mxu0 0
    %1627 = vmatprep.subr.bf16.mxu0 0
    %1628 = vmatpush1.bf16.msra.mxu0 0
    %1629 = vmatprep.mubr.bf16.mxu0 0
    %1630 = vmatmul.mubr.bf16.gmra.mrb[0].mxu0 %v1595
    %v1631 = vpop.f32.mrb[0].mxu0
    %v1632 = vadd.f32 %v1581, %v1631
    %v1633 = vpop.f32.mrb[0].mxu0
    %v1634 = vpop.f32.mrb[0].mxu0
    %v1635 = vadd.f32 %v1581, %v1634
    %v1636 = vpop.f32.mrb[0].mxu0
    %1637 = vdwg.mxu0
    %v1638 = vadd.f32 %v1065, %v1632
    %v1639 = vadd.f32 %v1066, %v1635
    %v1640 = vsel %vm302, %v1638, 0.0
    %1641 = vadd.xlane.f32.xlu0 %v1640
    %v1642 = vpop.xlane.xlu0 %1641
    %v1643 = vsel %vm306, %v1639, 0.0
    %1644 = vadd.xlane.f32.xlu0 %v1643
    %v1645 = vpop.xlane.xlu0 %1644
    %v1646 = vmul.f32 %v1642, %v310
    %v1647 = vmul.f32 %v1645, %v310
    %v1648 = vsub.f32 %v1638, %v1646
    %v1649 = vsub.f32 %v1639, %v1647
    %v1650 = vmul.f32 %v1648, %v1648
    %v1651 = vmul.f32 %v1649, %v1649
    %v1652 = vsel %vm302, %v1650, 0.0
    %1653 = vadd.xlane.f32.xlu0 %v1652
    %v1654 = vpop.xlane.xlu0 %1653
    %v1655 = vsel %vm306, %v1651, 0.0
    %1656 = vadd.xlane.f32.xlu0 %v1655
    %v1657 = vpop.xlane.xlu0 %1656
    %v1658 = vmul.f32 %v1654, %v310
    %v1659 = vmul.f32 %v1657, %v310
    %v1660 = vadd.f32 %v1658, 1e-12
    %v1661 = vadd.f32 %v1659, 1e-12
    %v1662 = vrsqrt.pop %v1660
    %v1663 = vrsqrt.pop %v1661
    %v1664 = vmul.f32 %v1648, %v1662
    %v1665 = vmul.f32 %v1649, %v1663
    %v1666 = vlaneseq
    %v1667 = vshrl.u32 %v1666, 7
    %v1668 = vsub.s32 0, %v1667
    %v1669 = vrot.slane %v1089, %v1668
    %v1670 = vmul.f32 %v1664, %v1669
    %v1671 = vmul.f32 %v1665, %v1669
    %v1672 = vlaneseq
    %v1673 = vshrl.u32 %v1672, 7
    %v1674 = vsub.s32 0, %v1673
    %v1675 = vrot.slane %v1090, %v1674
    %v1676 = vadd.f32 %v1670, %v1675
    %v1677 = vadd.f32 %v1671, %v1675
    %v1678 = vpack.c.bf16 %v1677, %v1676
    %v1679 = vlaneseq
    %v1680 = vshrl.u32 %v1679, 7
    %v1681 = vsub.s32 0, %v1680
    %v1682 = vrot.slane %v1093, %v1681
    %v1687 = vunpack.c.l.b16 %v1075
    %v1688 = vunpack.c.l.b16 %v1076
    %v1689 = vunpack.c.l.b16 %v1077
    %v1690 = vunpack.c.l.b16 %v1078
    %v1691 = vpack.c.b16 %v1688, %v1687
    %v1692 = vpack.c.b16 %v1690, %v1689
    %v1696 = vsel %vm302, %v1678, 0
    %1698 = vmatprep.subr.bf16.mxu0 0
    %1699 = vmatpush1.bf16.msra.mxu0 %v1691
    %1700 = vmatprep.subr.bf16.mxu0 0
    %1701 = vmatpush1.bf16.msra.mxu0 %v1692
    %1702 = vmatprep.subr.bf16.mxu0 0
    %1703 = vmatpush1.bf16.msra.mxu0 0
    %1704 = vmatprep.subr.bf16.mxu0 0
    %1705 = vmatpush1.bf16.msra.mxu0 0
    %1706 = vmatprep.subr.bf16.mxu0 0
    %1707 = vmatpush1.bf16.msra.mxu0 0
    %1708 = vmatprep.subr.bf16.mxu0 0
    %1709 = vmatpush1.bf16.msra.mxu0 0
    %1710 = vmatprep.subr.bf16.mxu0 0
    %1711 = vmatpush1.bf16.msra.mxu0 0
    %1712 = vmatprep.subr.bf16.mxu0 0
    %1713 = vmatpush1.bf16.msra.mxu0 0
    %1714 = vmatprep.subr.bf16.mxu0 0
    %1715 = vmatpush1.bf16.msra.mxu0 0
    %1716 = vmatprep.subr.bf16.mxu0 0
    %1717 = vmatpush1.bf16.msra.mxu0 0
    %1718 = vmatprep.subr.bf16.mxu0 0
    %1719 = vmatpush1.bf16.msra.mxu0 0
    %1720 = vmatprep.subr.bf16.mxu0 0
    %1721 = vmatpush1.bf16.msra.mxu0 0
    %1722 = vmatprep.subr.bf16.mxu0 0
    %1723 = vmatpush1.bf16.msra.mxu0 0
    %1724 = vmatprep.subr.bf16.mxu0 0
    %1725 = vmatpush1.bf16.msra.mxu0 0
    %1726 = vmatprep.subr.bf16.mxu0 0
    %1727 = vmatpush1.bf16.msra.mxu0 0
    %1728 = vmatprep.subr.bf16.mxu0 0
    %1729 = vmatpush1.bf16.msra.mxu0 0
    %1730 = vmatprep.mubr.bf16.mxu0 0
    %1731 = vmatmul.mubr.bf16.gmra.mrb[0].mxu0 %v1696
    %v1732 = vpop.f32.mrb[0].mxu0
    %v1733 = vadd.f32 %v1682, %v1732
    %v1734 = vpop.f32.mrb[0].mxu0
    %v1735 = vpop.f32.mrb[0].mxu0
    %v1736 = vadd.f32 %v1682, %v1735
    %v1737 = vpop.f32.mrb[0].mxu0
    %1738 = vdwg.mxu0
    %v1739 = vmul.f32 %v1733, 0.5
    %v1740 = vmul.f32 %v1736, 0.5
    %v1741 = vmul.f32 %v1733, 0.044715
    %v1742 = vmul.f32 %v1736, 0.044715
    %v1743 = vmul.f32 %v1741, %v1733
    %v1744 = vmul.f32 %v1742, %v1736
    %v1745 = vmul.f32 %v1743, %v1733
    %v1746 = vmul.f32 %v1744, %v1736
    %v1747 = vadd.f32 %v1733, %v1745
    %v1748 = vadd.f32 %v1736, %v1746
    %v1749 = vmul.f32 %v1747, 0.7978846
    %v1750 = vmul.f32 %v1748, 0.7978846
    %v1751 = vtanh.pop %v1749
    %v1752 = vtanh.pop %v1750
    %v1753 = vadd.f32 %v1751, 1.0
    %v1754 = vadd.f32 %v1752, 1.0
    %v1755 = vmul.f32 %v1739, %v1753
    %v1756 = vmul.f32 %v1740, %v1754
    %v1757 = vpack.c.bf16 %v1756, %v1755
    %v1758 = vlaneseq
    %v1759 = vshrl.u32 %v1758, 7
    %v1760 = vsub.s32 0, %v1759
    %v1761 = vrot.slane %v1094, %v1760
    %v1770 = vunpack.c.l.b16 %v1079
    %v1771 = vunpack.c.l.b16 %v1080
    %v1772 = vunpack.c.l.b16 %v1081
    %v1773 = vunpack.c.l.b16 %v1082
    %v1774 = vunpack.c.l.b16 %v1083
    %v1775 = vunpack.c.l.b16 %v1084
    %v1776 = vunpack.c.l.b16 %v1085
    %v1777 = vunpack.c.l.b16 %v1086
    %v1778 = vpack.c.b16 %v1771, %v1770
    %v1779 = vpack.c.b16 %v1773, %v1772
    %v1780 = vpack.c.b16 %v1775, %v1774
    %v1781 = vpack.c.b16 %v1777, %v1776
    %v1787 = vsel %vm148, %v1757, 0
    %1789 = vmatprep.subr.bf16.mxu0 0
    %1790 = vmatpush1.bf16.msra.mxu0 %v1778
    %1791 = vmatprep.subr.bf16.mxu0 0
    %1792 = vmatpush1.bf16.msra.mxu0 %v1779
    %1793 = vmatprep.subr.bf16.mxu0 0
    %1794 = vmatpush1.bf16.msra.mxu0 %v1780
    %1795 = vmatprep.subr.bf16.mxu0 0
    %1796 = vmatpush1.bf16.msra.mxu0 %v1781
    %1797 = vmatprep.subr.bf16.mxu0 0
    %1798 = vmatpush1.bf16.msra.mxu0 0
    %1799 = vmatprep.subr.bf16.mxu0 0
    %1800 = vmatpush1.bf16.msra.mxu0 0
    %1801 = vmatprep.subr.bf16.mxu0 0
    %1802 = vmatpush1.bf16.msra.mxu0 0
    %1803 = vmatprep.subr.bf16.mxu0 0
    %1804 = vmatpush1.bf16.msra.mxu0 0
    %1805 = vmatprep.subr.bf16.mxu0 0
    %1806 = vmatpush1.bf16.msra.mxu0 0
    %1807 = vmatprep.subr.bf16.mxu0 0
    %1808 = vmatpush1.bf16.msra.mxu0 0
    %1809 = vmatprep.subr.bf16.mxu0 0
    %1810 = vmatpush1.bf16.msra.mxu0 0
    %1811 = vmatprep.subr.bf16.mxu0 0
    %1812 = vmatpush1.bf16.msra.mxu0 0
    %1813 = vmatprep.subr.bf16.mxu0 0
    %1814 = vmatpush1.bf16.msra.mxu0 0
    %1815 = vmatprep.subr.bf16.mxu0 0
    %1816 = vmatpush1.bf16.msra.mxu0 0
    %1817 = vmatprep.subr.bf16.mxu0 0
    %1818 = vmatpush1.bf16.msra.mxu0 0
    %1819 = vmatprep.subr.bf16.mxu0 0
    %1820 = vmatpush1.bf16.msra.mxu0 0
    %1821 = vmatprep.mubr.bf16.mxu0 0
    %1822 = vmatmul.mubr.bf16.gmra.mrb[0].mxu0 %v1787
    %v1823 = vpop.f32.mrb[0].mxu0
    %v1824 = vadd.f32 %v1761, %v1823
    %v1825 = vpop.f32.mrb[0].mxu0
    %v1826 = vpop.f32.mrb[0].mxu0
    %v1827 = vadd.f32 %v1761, %v1826
    %v1828 = vpop.f32.mrb[0].mxu0
    %1829 = vdwg.mxu0
    %v1830 = vadd.f32 %v1638, %v1824
    %v1831 = vadd.f32 %v1639, %v1827
    %v1833 = vsel %vm406, %v66, 0
    %v1836 = vsel %vm422, %v1831, 0
    %1838 = vmatprep.subr.mxu0 0.0
    %1839 = vmatpush1.msra.mxu0 %v1830
    %1840 = vmatprep.subr.mxu0 0.0
    %1841 = vmatpush1.msra.mxu0 %v1836
    %1842 = vmatprep.subr.mxu0 0.0
    %1843 = vmatpush1.msra.mxu0 0.0
    %1844 = vmatprep.subr.mxu0 0.0
    %1845 = vmatpush1.msra.mxu0 0.0
    %1846 = vmatprep.subr.mxu0 0.0
    %1847 = vmatpush1.msra.mxu0 0.0
    %1848 = vmatprep.subr.mxu0 0.0
    %1849 = vmatpush1.msra.mxu0 0.0
    %1850 = vmatprep.subr.mxu0 0.0
    %1851 = vmatpush1.msra.mxu0 0.0
    %1852 = vmatprep.subr.mxu0 0.0
    %1853 = vmatpush1.msra.mxu0 0.0
    %1854 = vmatprep.subr.mxu0 0.0
    %1855 = vmatpush1.msra.mxu0 0.0
    %1856 = vmatprep.subr.mxu0 0.0
    %1857 = vmatpush1.msra.mxu0 0.0
    %1858 = vmatprep.subr.mxu0 0.0
    %1859 = vmatpush1.msra.mxu0 0.0
    %1860 = vmatprep.subr.mxu0 0.0
    %1861 = vmatpush1.msra.mxu0 0.0
    %1862 = vmatprep.subr.mxu0 0.0
    %1863 = vmatpush1.msra.mxu0 0.0
    %1864 = vmatprep.subr.mxu0 0.0
    %1865 = vmatpush1.msra.mxu0 0.0
    %1866 = vmatprep.subr.mxu0 0.0
    %1867 = vmatpush1.msra.mxu0 0.0
    %1868 = vmatprep.subr.mxu0 0.0
    %1869 = vmatpush1.msra.mxu0 0.0
    %1870 = vmatprep.subr.mxu0 0.0
    %1871 = vmatpush1.msra.mxu0 0.0
    %1872 = vmatprep.subr.mxu0 0.0
    %1873 = vmatpush1.msra.mxu0 0.0
    %1874 = vmatprep.subr.mxu0 0.0
    %1875 = vmatpush1.msra.mxu0 0.0
    %1876 = vmatprep.subr.mxu0 0.0
    %1877 = vmatpush1.msra.mxu0 0.0
    %1878 = vmatprep.subr.mxu0 0.0
    %1879 = vmatpush1.msra.mxu0 0.0
    %1880 = vmatprep.subr.mxu0 0.0
    %1881 = vmatpush1.msra.mxu0 0.0
    %1882 = vmatprep.subr.mxu0 0.0
    %1883 = vmatpush1.msra.mxu0 0.0
    %1884 = vmatprep.subr.mxu0 0.0
    %1885 = vmatpush1.msra.mxu0 0.0
    %1886 = vmatprep.subr.mxu0 0.0
    %1887 = vmatpush1.msra.mxu0 0.0
    %1888 = vmatprep.subr.mxu0 0.0
    %1889 = vmatpush1.msra.mxu0 0.0
    %1890 = vmatprep.subr.mxu0 0.0
    %1891 = vmatpush1.msra.mxu0 0.0
    %1892 = vmatprep.subr.mxu0 0.0
    %1893 = vmatpush1.msra.mxu0 0.0
    %1894 = vmatprep.subr.mxu0 0.0
    %1895 = vmatpush1.msra.mxu0 0.0
    %1896 = vmatprep.subr.mxu0 0.0
    %1897 = vmatpush1.msra.mxu0 0.0
    %1898 = vmatprep.subr.mxu0 0.0
    %1899 = vmatpush1.msra.mxu0 0.0
    %1900 = vmatprep.subr.mxu0 0.0
    %1901 = vmatpush1.msra.mxu0 0.0
    %1902 = vmatprep.mubr.f32.mxu0 0.0
    %1903 = vmatmul.mubr.f32.gmra.mrb[0].mxu0 %v1833
    %v1904 = vpop.f32.mrb[0].mxu0
    %v1905 = vadd.f32 0.0, %v1904
    %v1906 = vpop.f32.mrb[0].mxu0
    %1907 = vdwg.mxu0
    %v1908 = vsel %vm306, %v1905, 0.0
    %1909 = vadd.xlane.f32.xlu0 %v1908
    %v1910 = vpop.xlane.xlu0 %1909
    %v1911 = vmul.f32 %v1910, %v310
    %v1912 = vsub.f32 %v1905, %v1911
    %v1913 = vmul.f32 %v1912, %v1912
    %v1914 = vsel %vm306, %v1913, 0.0
    %1915 = vadd.xlane.f32.xlu0 %v1914
    %v1916 = vpop.xlane.xlu0 %1915
    %v1917 = vmul.f32 %v1916, %v310
    %v1918 = vadd.f32 %v1917, 1e-12
    %v1919 = vrsqrt.pop %v1918
    %v1920 = vmul.f32 %v1912, %v1919
    %v1921 = vlaneseq
    %v1922 = vshrl.u32 %v1921, 7
    %v1923 = vsub.s32 0, %v1922
    %v1924 = vrot.slane %v67, %v1923
    %v1925 = vmul.f32 %v1920, %v1924
    %v1926 = vlaneseq
    %v1927 = vshrl.u32 %v1926, 7
    %v1928 = vsub.s32 0, %v1927
    %v1929 = vrot.slane %v68, %v1928
    %v1930 = vadd.f32 %v1925, %v1929
    %v1931 = vpack.c.bf16 %v1930, %v1930
    %v1932 = vlaneseq
    %v1933 = vshrl.u32 %v1932, 7
    %v1934 = vsub.s32 0, %v1933
    %v1935 = vrot.slane %v69, %v1934
    %v1940 = vunpack.c.l.b16 %v41
    %v1941 = vunpack.c.l.b16 %v42
    %v1942 = vunpack.c.l.b16 %v43
    %v1943 = vunpack.c.l.b16 %v44
    %v1944 = vpack.c.b16 %v1941, %v1940
    %v1945 = vpack.c.b16 %v1943, %v1942
    %v1949 = vsel %vm302, %v1931, 0
    %1951 = vmatprep.subr.bf16.mxu0 0
    %1952 = vmatpush1.bf16.msra.mxu0 %v1944
    %1953 = vmatprep.subr.bf16.mxu0 0
    %1954 = vmatpush1.bf16.msra.mxu0 %v1945
    %1955 = vmatprep.subr.bf16.mxu0 0
    %1956 = vmatpush1.bf16.msra.mxu0 0
    %1957 = vmatprep.subr.bf16.mxu0 0
    %1958 = vmatpush1.bf16.msra.mxu0 0
    %1959 = vmatprep.subr.bf16.mxu0 0
    %1960 = vmatpush1.bf16.msra.mxu0 0
    %1961 = vmatprep.subr.bf16.mxu0 0
    %1962 = vmatpush1.bf16.msra.mxu0 0
    %1963 = vmatprep.subr.bf16.mxu0 0
    %1964 = vmatpush1.bf16.msra.mxu0 0
    %1965 = vmatprep.subr.bf16.mxu0 0
    %1966 = vmatpush1.bf16.msra.mxu0 0
    %1967 = vmatprep.subr.bf16.mxu0 0
    %1968 = vmatpush1.bf16.msra.mxu0 0
    %1969 = vmatprep.subr.bf16.mxu0 0
    %1970 = vmatpush1.bf16.msra.mxu0 0
    %1971 = vmatprep.subr.bf16.mxu0 0
    %1972 = vmatpush1.bf16.msra.mxu0 0
    %1973 = vmatprep.subr.bf16.mxu0 0
    %1974 = vmatpush1.bf16.msra.mxu0 0
    %1975 = vmatprep.subr.bf16.mxu0 0
    %1976 = vmatpush1.bf16.msra.mxu0 0
    %1977 = vmatprep.subr.bf16.mxu0 0
    %1978 = vmatpush1.bf16.msra.mxu0 0
    %1979 = vmatprep.subr.bf16.mxu0 0
    %1980 = vmatpush1.bf16.msra.mxu0 0
    %1981 = vmatprep.subr.bf16.mxu0 0
    %1982 = vmatpush1.bf16.msra.mxu0 0
    %1983 = vmatprep.mubr.bf16.mxu0 0
    %1984 = vmatmul.mubr.bf16.gmra.mrb[0].mxu0 %v1949
    %v1985 = vpop.f32.mrb[0].mxu0
    %v1986 = vadd.f32 %v1935, %v1985
    %v1987 = vpop.f32.mrb[0].mxu0
    %v1988 = vpop.f32.mrb[0].mxu0
    %v1989 = vpop.f32.mrb[0].mxu0
    %1990 = vdwg.mxu0
    %v1991 = vtanh.pop %v1986
    %1992 = vst.msk [vmem:[#allocation2] sm:$0x3] %vm306, %v1991
    // Predicated region
    $region14: #{visual_encoder_forward.1} parent=1 // pred_check
      _
    $region15: #{visual_encoder_forward.1} parent=1 // pred_check_branch
      %1994 = sbr.rel (0) target = $region17
    $region16: #{visual_encoder_forward.1} parent=1 // pred_region
      %s1996 = ssub.s32 32, 32
      %1997 = vsyncadd [#allocation3], %s1996
      %s1999 = sshll.u32 [#allocation2], 4
      %s2000 = int_to_ptr.vmem [resolvable:$true] %s1999
      %2002 = dma.vmem_to_hbm [thread:$0]  %s2000, 32, %s3, [#allocation3]
    $region17: #{visual_encoder_forward.1} parent=1 // pred_fallthru
      _
    // Predicated region
    $region18: #{visual_encoder_forward.1} parent=1 // pred_check
      _
    $region19: #{visual_encoder_forward.1} parent=1 // pred_check_branch
      %2004 = sbr.rel (0) target = $region21
    $region20: #{visual_encoder_forward.1} parent=1 // pred_region
      %2005 = dma.done [#allocation3], 32
    $region21: #{visual_encoder_forward.1} parent=1 // pred_fallthru
      _
    %2006 = vsyncpa [#allocation3], 1

</llo_original>
